<compile_context>
chip_gen: v6e
topology: v6e:2x2x1
jax: 0.10.0
libtpu: 0.0.40
codegen_flags: <defaults>
</compile_context>

<pallas_src>
import numpy as np
import jax
import jax.numpy as jnp
from jax import lax
from jax.experimental import pallas as pl
from jax.experimental.pallas import tpu as pltpu

IN_DIM = 16
EMBED_DIM = 32
TENSOR_STRIDE = 1
NEG = -1e30


def make_vertical_attention_kernel(in_dim, E, Cp, lo, hi, L, SB, P, G):
    """One grid step = TM (=SB*G) vertical columns, each padded to L slots.

    Rows are processed in SB superblocks of P(=128) rows (= G whole columns),
    so the attention core runs on full-width (P,P) tiles whose live ranges end
    at the per-superblock store into out_ref.
    """
    lo_f, hi_f = float(lo), float(hi)

    def kernel(x_ref, w_in_ref, w_out_ref, b_out_ref, out_ref):
        w_in = w_in_ref[...]     # (Cp, 3E): z row = 0, bias on valid row, k/sqrt(E)
        w_out = w_out_ref[...]   # (E, E)
        b_out = b_out_ref[...]   # (1, E)

        def superblock(b, carry):
            g0 = pl.multiple_of(b * G, G)
            X = x_ref[pl.ds(g0, G), :, :].reshape(P, Cp)      # (P, in_dim+2)
            ze = X[:, in_dim:in_dim + 1]                      # (P,1) encoded z
            valid = X[:, in_dim + 1:in_dim + 2]               # (P,1) 1=real point

            # fused in_proj -> [q | k/sqrt(E) | v]; in_proj bias rides on the
            # valid lane (exactly 1.0 for real points, 0 for padding).
            # (Casting X / w_in / p / att to bf16 here is the v6e/v7x MXU knob;
            #  keep ze/valid and the dz window test in f32.)
            qkv = jnp.dot(X, w_in, preferred_element_type=jnp.float32)
            q = qkv[:, :E]
            k = qkv[:, E:2 * E]
            v = qkv[:, 2 * E:]

            # s[dst, src] = k[dst] . q[src]   (1/sqrt(E) pre-folded into k)
            s = jnp.einsum("de,se->ds", k, q,
                           preferred_element_type=jnp.float32)

            # same-column + both-valid + z-window collapse into one window test
            # on the host-encoded z (single XLU transpose per superblock).
            dz = jnp.transpose(ze) - ze          # dz[dst, src] = z_src - z_dst
            s = jnp.where((dz >= lo_f) & (dz <= hi_f), s, NEG)

            # scatter_softmax over dst == row-wise softmax; masked entries
            # underflow to exactly 0 after the max subtraction and every row
            # keeps its self pair, so no second mask / denominator guard.
            s = s - jnp.max(s, axis=-1, keepdims=True)
            p = jnp.exp(s)
            p = p * pl.reciprocal(jnp.sum(p, axis=-1, keepdims=True), approx=True)

            # scatter_add(attn * v[src], index=dst) -> P @ V, then out_proj.
            att = jnp.dot(p, v, preferred_element_type=jnp.float32)      # (P, E)
            o = jnp.dot(att, w_out, preferred_element_type=jnp.float32) + b_out
            o = o * valid                          # zero the padding rows

            # scatter_mean + scatter_max over each column's L slots + sum
            o3 = o.reshape(G, L, E)
            m3 = valid.reshape(G, L, 1)
            cnt = jnp.maximum(jnp.sum(m3, axis=1), 1.0)                  # (G,1)
            mean_feat = jnp.sum(o3, axis=1) * pl.reciprocal(cnt, approx=True)
            max_feat = jnp.max(jnp.where(m3 > 0.0, o3, NEG), axis=1)
            out_ref[pl.ds(g0, G), :] = mean_feat + max_feat              # (G,E)
            return carry

        lax.fori_loop(0, SB, superblock, 0, unroll=True)

    return kernel


def vertical_attention_forward(C, F, params):
    """C: (N, 4) int coords (batch, x, y, z); F: (N, in_dim) float32 features.
    Returns (coor (M, 3), out (M, embed_dim), (lo, hi)) like the PyTorch module."""
    C = np.asarray(C)
    F = np.asarray(F, dtype=np.float32)
    N, in_dim = F.shape
    E = np.asarray(params["w_out"]).shape[0]

    # --- host glue: unique vertical columns (== x.C[:, :3].unique) ----------
    cols, inverse = np.unique(C[:, :3], axis=0, return_inverse=True)
    inverse = np.asarray(inverse).reshape(-1)
    M = cols.shape[0]

    # --- host glue: derive vertical kernel size from batch-0 columns --------
    mask0 = C[:, 0] == 0
    inv0 = inverse[mask0]
    z0 = C[mask0, 3].astype(np.int64)
    zmin = np.full(M, np.iinfo(np.int64).max)
    zmax = np.full(M, np.iinfo(np.int64).min)
    if inv0.size:
        np.minimum.at(zmin, inv0, z0)
        np.maximum.at(zmax, inv0, z0)
    present = zmax >= zmin
    diff = int((zmax[present] - zmin[present]).max()) if present.any() else 0
    ks = diff // TENSOR_STRIDE + 1
    # TODO(synk): MinkowskiEngine's exact offset convention for even kernel
    # sizes is not reproduced bit-exactly; centred window, extra offset on +z.
    lo = -((ks - 1) // 2) * TENSOR_STRIDE
    hi = (ks // 2) * TENSOR_STRIDE

    # --- tiling: L slots/column, G columns/superblock, SB superblocks/step --
    counts = np.bincount(inverse, minlength=M)
    L = max(8, int(2 ** np.ceil(np.log2(max(int(counts.max()), 1)))))
    P = max(128, L)                       # rows per superblock
    G = P // L                            # columns per superblock
    # target <= 2048 rows/step; keep >= 2 grid steps for small M (v7x: 2 TCs)
    SB = int(max(1, min(max(1, 2048 // P), -(-M // (2 * G)))))
    TM = SB * G                           # columns per grid step
    M_pad = int(-(-M // TM) * TM)

    # --- z encoding: same-column + validity folded into one window test -----
    z_all = C[:, 3].astype(np.float64)
    z_min = float(z_all.min())
    z_span = float(z_all.max()) - z_min
    BIG = float(2.0 ** np.ceil(np.log2(max(z_span + max(hi, -lo) + 2.0, 2.0))))
    PAD_Z = (G + 1) * BIG                 # farther than hi from any valid encoding
    # encodings stay exact integers in f32 as long as (G+1)*BIG < 2**24

    Cp = in_dim + 2                       # features + encoded z + valid lanes
    packed = np.zeros((M_pad, L, Cp), np.float32)
    packed[:, :, in_dim] = PAD_Z
    order = np.argsort(inverse, kind="stable")
    inv_sorted = inverse[order]
    col_start = np.zeros(M, np.int64)
    col_start[1:] = np.cumsum(counts)[:-1]
    slot = np.arange(N) - col_start[inv_sorted]
    packed[inv_sorted, slot, :in_dim] = F[order]
    packed[inv_sorted, slot, in_dim] = (
        (z_all[order] - z_min) + (inv_sorted % G) * BIG).astype(np.float32)
    packed[inv_sorted, slot, in_dim + 1] = 1.0

    # --- fused in_proj weight: [q | k/sqrt(E) | v], bias on the valid lane ---
    w_in = np.zeros((Cp, 3 * E), np.float32)
    w_in[:in_dim, :] = np.asarray(params["w_in"], np.float32)
    w_in[in_dim + 1, :] = np.asarray(params["b_in"], np.float32)
    w_in[:, E:2 * E] *= 1.0 / np.sqrt(E)            # fold 1/sqrt(E) into k
    w_out = np.asarray(params["w_out"], np.float32)
    b_out = np.asarray(params["b_out"], np.float32).reshape(1, E)

    # --- Pallas call ---------------------------------------------------------
    kernel = make_vertical_attention_kernel(in_dim, E, Cp, lo, hi, L, SB, P, G)
    out = pl.pallas_call(
        kernel,
        out_shape=jax.ShapeDtypeStruct((M_pad, E), jnp.float32),
        grid=(M_pad // TM,),
        in_specs=[
            pl.BlockSpec((TM, L, Cp), lambda m: (m, 0, 0)),
            pl.BlockSpec((Cp, 3 * E), lambda m: (0, 0)),
            pl.BlockSpec((E, E), lambda m: (0, 0)),
            pl.BlockSpec((1, E), lambda m: (0, 0)),
        ],
        out_specs=pl.BlockSpec((TM, E), lambda m: (m, 0)),
        compiler_params=pltpu.CompilerParams(
            dimension_semantics=("parallel",),
            vmem_limit_bytes=32 * 1024 * 1024),
    )(jnp.asarray(packed), jnp.asarray(w_in), jnp.asarray(w_out),
      jnp.asarray(b_out))

    return jnp.asarray(cols), out[:M], (lo, hi)


def reference_numpy(C, F, w_in, b_in, w_out, b_out, lo, hi, E):
    """Pure-numpy reference mirroring the PyTorch forward (scatter ops)."""
    C = np.asarray(C)
    F = np.asarray(F, dtype=np.float64)
    cols, inverse = np.unique(C[:, :3], axis=0, return_inverse=True)
    inverse = np.asarray(inverse).reshape(-1)
    N = C.shape[0]

    qkv = F @ np.asarray(w_in, np.float64) + np.asarray(b_in, np.float64)
    q, k, v = qkv[:, :E], qkv[:, E:2 * E], qkv[:, 2 * E:]

    z = C[:, 3].astype(np.float64)
    same = inverse[:, None] == inverse[None, :]
    dz = z[:, None] - z[None, :]               # dz[src, dst] = z_src - z_dst
    pair = same & (dz >= lo) & (dz <= hi)
    src, dst = np.nonzero(pair)                # kernel_map[0], kernel_map[1]

    attn = (q[src] * k[dst]).sum(-1) / np.sqrt(E)
    mx = np.full(N, -np.inf)
    np.maximum.at(mx, dst, attn)
    ex = np.exp(attn - mx[dst])
    den = np.zeros(N)
    np.add.at(den, dst, ex)
    p = ex / den[dst]

    attended = np.zeros((N, E))
    np.add.at(attended, dst, p[:, None] * v[src])
    attended = attended @ np.asarray(w_out, np.float64) + np.asarray(b_out, np.float64)

    M = cols.shape[0]
    mean_feat = np.zeros((M, E))
    cnt = np.zeros(M)
    np.add.at(mean_feat, inverse, attended)
    np.add.at(cnt, inverse, 1.0)
    mean_feat /= cnt[:, None]
    max_feat = np.full((M, E), -np.inf)
    np.maximum.at(max_feat, inverse, attended)
    return cols, (max_feat + mean_feat).astype(np.float32)


if __name__ == "__main__":
    key = jax.random.PRNGKey(0)
    kcoord, kfeat, kw1, kb1, kw2, kb2 = jax.random.split(key, 6)

    # synthetic sparse coordinates: (batch, x, y, z), batch=2, 4x4 xy, z in 0..5
    b, xg, yg, zg = np.meshgrid(np.arange(2), np.arange(4), np.arange(4),
                                np.arange(6), indexing="ij")
    cand = np.stack([b, xg, yg, zg], axis=-1).reshape(-1, 4).astype(np.int32)
    perm = np.asarray(jax.random.permutation(kcoord, cand.shape[0]))
    N = 96
    C = cand[perm[:N]]

    feats = jax.random.normal(kfeat, (N, IN_DIM), dtype=jnp.float32)

    # deterministic params (in_proj: in_dim -> 3*embed_dim, out_proj: E -> E)
    E = EMBED_DIM
    w_in = jax.random.normal(kw1, (IN_DIM, 3 * E), dtype=jnp.float32) / np.sqrt(IN_DIM)
    b_in = jax.random.normal(kb1, (3 * E,), dtype=jnp.float32) * 0.01
    w_out = jax.random.normal(kw2, (E, E), dtype=jnp.float32) / np.sqrt(E)
    b_out = jax.random.normal(kb2, (E,), dtype=jnp.float32) * 0.01

    params = dict(
        w_in=np.asarray(w_in), b_in=np.asarray(b_in),
        w_out=np.asarray(w_out), b_out=np.asarray(b_out),
    )

    coor, out, (lo, hi) = vertical_attention_forward(C, np.asarray(feats), params)
    out = jax.block_until_ready(out)

    coor_ref, out_ref = reference_numpy(C, np.asarray(feats),
                                        np.asarray(w_in), np.asarray(b_in),
                                        np.asarray(w_out), np.asarray(b_out),
                                        lo, hi, E)

    assert np.array_equal(np.asarray(coor), coor_ref)
    err = float(np.max(np.abs(np.asarray(out) - out_ref)))
    assert np.allclose(np.asarray(out), out_ref, rtol=5e-3, atol=5e-3), err
    print("KERNEL_OK")
</pallas_src>

<mosaic_0001>
module attributes {stable_mosaic.version = 11 : i64} {
  func.func @kernel(%arg0: i32, %arg1: memref<16x8x18xf32, #tpu.memory_space<vmem>>, %arg2: memref<18x96xf32, #tpu.memory_space<vmem>>, %arg3: memref<32x32xf32, #tpu.memory_space<vmem>>, %arg4: memref<1x32xf32, #tpu.memory_space<vmem>>, %arg5: memref<16x32xf32, #tpu.memory_space<vmem>>) attributes {dimension_semantics = [#tpu.dimension_semantics<parallel>], iteration_bounds = array<i64: 2>, scalar_prefetch = 0 : i64, scratch_operands = 0 : i64, tpu.core_type = #tpu.core_type<tc>, window_params = [{transform_indices = @transform_0, window_bounds = array<i64: 16, 8, 18>}, {pipeline_mode = #tpu.pipeline_mode<synchronous>, transform_indices = @transform_1, window_bounds = array<i64: 18, 96>}, {pipeline_mode = #tpu.pipeline_mode<synchronous>, transform_indices = @transform_2, window_bounds = array<i64: 32, 32>}, {pipeline_mode = #tpu.pipeline_mode<synchronous>, transform_indices = @transform_3, window_bounds = array<i64: 1, 32>}, {transform_indices = @transform_4, window_bounds = array<i64: 16, 32>}]} {
    %c0 = arith.constant 0 : index
    %c0_0 = arith.constant 0 : index
    %0 = vector.load %arg2[%c0, %c0_0] : memref<18x96xf32, #tpu.memory_space<vmem>>, vector<18x96xf32>
    %c0_1 = arith.constant 0 : index
    %c0_2 = arith.constant 0 : index
    %1 = vector.load %arg3[%c0_1, %c0_2] : memref<32x32xf32, #tpu.memory_space<vmem>>, vector<32x32xf32>
    %c0_3 = arith.constant 0 : index
    %c0_4 = arith.constant 0 : index
    %2 = vector.load %arg4[%c0_3, %c0_4] : memref<1x32xf32, #tpu.memory_space<vmem>>, vector<1x32xf32>
    %c0_i32 = arith.constant 0 : i32
    %c16_i32 = arith.constant 16 : i32
    %3 = arith.muli %c0_i32, %c16_i32 : i32
    %4 = tpu.assume_multiple %3, 16 : i32
    %5 = arith.index_cast %4 : i32 to index
    %c0_5 = arith.constant 0 : index
    %c0_6 = arith.constant 0 : index
    %6 = vector.load %arg1[%5, %c0_5, %c0_6] : memref<16x8x18xf32, #tpu.memory_space<vmem>>, vector<16x8x18xf32>
    %7 = vector.shape_cast %6 : vector<16x8x18xf32> to vector<128x18xf32>
    %8 = vector.extract_strided_slice %7 {offsets = [0, 16], sizes = [128, 1], strides = [1, 1]} : vector<128x18xf32> to vector<128x1xf32>
    %9 = vector.extract_strided_slice %7 {offsets = [0, 17], sizes = [128, 1], strides = [1, 1]} : vector<128x18xf32> to vector<128x1xf32>
    %cst = arith.constant dense<0.000000e+00> : vector<128x96xf32>
    %10 = tpu.matmul %7, %0, %cst {dimension_numbers = #tpu.dot_dimension_numbers<[1], [0], [0], [1], [0, 0, 1, 1], [], []>} : vector<128x18xf32>, vector<18x96xf32>, vector<128x96xf32> -> vector<128x96xf32>
    %11 = vector.extract_strided_slice %10 {offsets = [0, 0], sizes = [128, 32], strides = [1, 1]} : vector<128x96xf32> to vector<128x32xf32>
    %12 = vector.extract_strided_slice %10 {offsets = [0, 32], sizes = [128, 32], strides = [1, 1]} : vector<128x96xf32> to vector<128x32xf32>
    %13 = vector.extract_strided_slice %10 {offsets = [0, 64], sizes = [128, 32], strides = [1, 1]} : vector<128x96xf32> to vector<128x32xf32>
    "tpu.trace_start"() <{level = 10 : i32, message = "de,se->ds"}> : () -> ()
    %cst_7 = arith.constant dense<0.000000e+00> : vector<128x128xf32>
    %14 = tpu.matmul %12, %11, %cst_7 {dimension_numbers = #tpu.dot_dimension_numbers<[1], [1], [0], [0], [0, 0, 1, 0], [], []>} : vector<128x32xf32>, vector<128x32xf32>, vector<128x128xf32> -> vector<128x128xf32>
    "tpu.trace_stop"() : () -> ()
    %15 = tpu.transpose %8, [1, 0] : vector<128x1xf32> -> vector<1x128xf32>
    %16 = vector.broadcast %15 : vector<1x128xf32> to vector<128x128xf32>
    %17 = vector.broadcast %8 : vector<128x1xf32> to vector<128x128xf32>
    %18 = arith.subf %16, %17 : vector<128x128xf32>
    %cst_8 = arith.constant -2.000000e+00 : f32
    %19 = vector.broadcast %cst_8 : f32 to vector<128x128xf32>
    %20 = arith.cmpf oge, %18, %19 : vector<128x128xf32>
    %cst_9 = arith.constant 3.000000e+00 : f32
    %21 = vector.broadcast %cst_9 : f32 to vector<128x128xf32>
    %22 = arith.cmpf ole, %18, %21 : vector<128x128xf32>
    %23 = arith.andi %20, %22 : vector<128x128xi1>
    %cst_10 = arith.constant -1.000000e+30 : f32
    %24 = vector.broadcast %cst_10 : f32 to vector<128x128xf32>
    %25 = arith.select %23, %14, %24 : vector<128x128xi1>, vector<128x128xf32>
    %cst_11 = arith.constant dense<0xFF800000> : vector<128xf32>
    %26 = vector.multi_reduction <maximumf>, %25, %cst_11 [1] : vector<128x128xf32> to vector<128xf32>
    %27 = vector.shape_cast %26 : vector<128xf32> to vector<128x1xf32>
    %28 = vector.broadcast %27 : vector<128x1xf32> to vector<128x128xf32>
    %29 = arith.subf %25, %28 : vector<128x128xf32>
    %30 = math.exp %29 : vector<128x128xf32>
    %cst_12 = arith.constant dense<0.000000e+00> : vector<128xf32>
    %31 = vector.multi_reduction <add>, %30, %cst_12 [1] : vector<128x128xf32> to vector<128xf32>
    %32 = vector.shape_cast %31 : vector<128xf32> to vector<128x1xf32>
    %33 = tpu.reciprocal %32 {approx = true} : vector<128x1xf32> -> vector<128x1xf32>
    %34 = vector.broadcast %33 : vector<128x1xf32> to vector<128x128xf32>
    %35 = arith.mulf %30, %34 : vector<128x128xf32>
    %cst_13 = arith.constant dense<0.000000e+00> : vector<128x32xf32>
    %36 = tpu.matmul %35, %13, %cst_13 {dimension_numbers = #tpu.dot_dimension_numbers<[1], [0], [0], [1], [0, 0, 1, 1], [], []>} : vector<128x128xf32>, vector<128x32xf32>, vector<128x32xf32> -> vector<128x32xf32>
    %cst_14 = arith.constant dense<0.000000e+00> : vector<128x32xf32>
    %37 = tpu.matmul %36, %1, %cst_14 {dimension_numbers = #tpu.dot_dimension_numbers<[1], [0], [0], [1], [0, 0, 1, 1], [], []>} : vector<128x32xf32>, vector<32x32xf32>, vector<128x32xf32> -> vector<128x32xf32>
    %38 = vector.broadcast %2 : vector<1x32xf32> to vector<128x32xf32>
    %39 = arith.addf %37, %38 : vector<128x32xf32>
    %40 = vector.broadcast %9 : vector<128x1xf32> to vector<128x32xf32>
    %41 = arith.mulf %39, %40 : vector<128x32xf32>
    %42 = vector.shape_cast %41 : vector<128x32xf32> to vector<16x8x32xf32>
    %43 = vector.shape_cast %9 : vector<128x1xf32> to vector<16x8x1xf32>
    %cst_15 = arith.constant dense<0.000000e+00> : vector<16x1xf32>
    %44 = vector.multi_reduction <add>, %43, %cst_15 [1] : vector<16x8x1xf32> to vector<16x1xf32>
    %cst_16 = arith.constant 1.000000e+00 : f32
    %45 = vector.broadcast %cst_16 : f32 to vector<16x1xf32>
    %46 = arith.maximumf %44, %45 : vector<16x1xf32>
    %cst_17 = arith.constant dense<0.000000e+00> : vector<16x32xf32>
    %47 = vector.multi_reduction <add>, %42, %cst_17 [1] : vector<16x8x32xf32> to vector<16x32xf32>
    %48 = tpu.reciprocal %46 {approx = true} : vector<16x1xf32> -> vector<16x1xf32>
    %49 = vector.broadcast %48 : vector<16x1xf32> to vector<16x32xf32>
    %50 = arith.mulf %47, %49 : vector<16x32xf32>
    %cst_18 = arith.constant 0.000000e+00 : f32
    %51 = vector.broadcast %cst_18 : f32 to vector<16x8x1xf32>
    %52 = arith.cmpf ogt, %43, %51 : vector<16x8x1xf32>
    %cst_19 = arith.constant -1.000000e+30 : f32
    %53 = vector.shape_cast %52 : vector<16x8x1xi1> to vector<16x8x1xi1>
    %54 = vector.broadcast %53 : vector<16x8x1xi1> to vector<16x8x32xi1>
    %55 = vector.broadcast %cst_19 : f32 to vector<16x8x32xf32>
    %56 = arith.select %54, %42, %55 : vector<16x8x32xi1>, vector<16x8x32xf32>
    %cst_20 = arith.constant dense<0xFF800000> : vector<16x32xf32>
    %57 = vector.multi_reduction <maximumf>, %56, %cst_20 [1] : vector<16x8x32xf32> to vector<16x32xf32>
    %58 = arith.addf %50, %57 : vector<16x32xf32>
    %59 = arith.index_cast %4 : i32 to index
    %c0_21 = arith.constant 0 : index
    %60 = vector.load %arg5[%59, %c0_21] : memref<16x32xf32, #tpu.memory_space<vmem>>, vector<16x32xf32>
    tpu.vector_store %arg5[%59, %c0_21], %58 {strides = array<i32>} : memref<16x32xf32, #tpu.memory_space<vmem>>, vector<16x32xf32>,
    %c1_i32 = arith.constant 1 : i32
    return
  }
  func.func @transform_0(%arg0: i32) -> (i32, i32, i32) {
    %c0_i32 = arith.constant 0 : i32
    %c0_i32_0 = arith.constant 0 : i32
    %c0_i32_1 = arith.constant 0 : i32
    return %arg0, %c0_i32, %c0_i32_0 : i32, i32, i32
  }
  func.func @transform_1(%arg0: i32) -> (i32, i32) {
    %c0_i32 = arith.constant 0 : i32
    %c0_i32_0 = arith.constant 0 : i32
    %c0_i32_1 = arith.constant 0 : i32
    return %c0_i32, %c0_i32_0 : i32, i32
  }
  func.func @transform_2(%arg0: i32) -> (i32, i32) {
    %c0_i32 = arith.constant 0 : i32
    %c0_i32_0 = arith.constant 0 : i32
    %c0_i32_1 = arith.constant 0 : i32
    return %c0_i32, %c0_i32_0 : i32, i32
  }
  func.func @transform_3(%arg0: i32) -> (i32, i32) {
    %c0_i32 = arith.constant 0 : i32
    %c0_i32_0 = arith.constant 0 : i32
    %c0_i32_1 = arith.constant 0 : i32
    return %c0_i32, %c0_i32_0 : i32, i32
  }
  func.func @transform_4(%arg0: i32) -> (i32, i32) {
    %c0_i32 = arith.constant 0 : i32
    %c0_i32_0 = arith.constant 0 : i32
    return %arg0, %c0_i32 : i32, i32
  }
}

</mosaic_0001>

<llo_original>
// kernel: tpu_custom_call.1
$region0: #{tpu_custom_call.1}
  #allocation0 [shape = 'u32[]', space=smem, size = 0x4, offset = 0x4, fixed_abs, tag = 'smem constant byte address 0x4 - core index']
  #allocation1 [shape = 'u32[144,128]{1,0:T(1,128)}', space=vmem, size = 0x12000, scoped, tag = 'internal scratch']
  %s0 = inlined_call_operand.vmem [shape: f32[32,8,18], index: 0, kind: input, shape index: {}]
  %s1 = inlined_call_operand.vmem [shape: f32[18,96], index: 1, kind: input, shape index: {}]
  %s2 = inlined_call_operand.vmem [shape: f32[32,32], index: 2, kind: input, shape index: {}]
  %s3 = inlined_call_operand.vmem [shape: f32[1,32], index: 3, kind: input, shape index: {}]
  %s4 = inlined_call_operand.hbm [shape: f32[32,32], index: 4, kind: output, shape index: {}]
  %s5 = sld [smem:[#allocation0]]
  $region49: #{tpu_custom_call.1} parent=0
    _
  %s7 = ssub.s32 1, %s5
  %s8 = scalar_select 0, %s7, %s5
  $region1: #{tpu_custom_call.1} parent=0
    #allocation2 [shape = 'u8[16384]{0}', space=vmem, size = 0x4000, scoped, tag = 'output window, operand 0']
    #allocation3 [shape = 's32[2]{0}', space=sflag, size = 0x8, scoped, tag = 'scoped memory for tpu_custom_call.1']
    %9 = vsyncpa [#allocation3], 0
    %s10 = scalar_lea.sflag [#allocation3], 1
    %11 = vsyncpa %s10, 0
    loop: start=0, step=1, limit=4
    $region2: #{tpu_custom_call.1} parent=1 // loop_pre_header
      _
    $region3: #{tpu_custom_call.1} parent=1 // loop_header
      %s13 = sphi 0, %s17
      %p14 = scmp.ge.s32.totalorder %s13, 4
      %s23 = sphi 0, %s25
      %s26 = sphi 0, %s23
      %s27 = sphi 0, %s26
      %s43 = sphi 0, %s27
      %s47 = sphi 0, %s47
      %s49 = sphi 0, %s47
      %s50 = sphi 0, %s49
      %s64 = sphi 0, %s50
      %s68 = sphi 0, %s68
      %s70 = sphi 0, %s68
      %s71 = sphi 0, %s70
      %s85 = sphi 0, %s71
      %s89 = sphi 0, %s89
      %s91 = sphi 0, %s89
      %s92 = sphi 0, %s91
      %s106 = sphi 0, %s92
      %s112 = sphi 0, %s114
      %s115 = sphi 0, %s112
      %s116 = sphi 0, %s115
      %s132 = sphi 0, %s116
    $region4: #{tpu_custom_call.1} parent=1 // loop_header_branch
      %16 = sbr.rel (%p14) target = $region8
    $region5: #{tpu_custom_call.1} parent=1 // loop_body
      %s18 = ssub.s32 %s13, 1
      %s19 = ssub.s32 %s13, 2
      %s20 = sadd.s32 %s13, 1
      %s21 = ssub.s32 %s13, %s20
      %p22 = scmp.eq.s32.totalorder %s21, 0
      %s24 = sadd.s32 %s23, 1
      %s25 = scalar_select %p22, %s23, %s24
      %p28 = pneg %p22
      %p29 = scmp.eq.s32.totalorder %s13, 1
      %p30 = por %p28, %p29
      %p31 = scmp.ne.s32.totalorder %s23, %s26
      %p32 = scmp.eq.s32.totalorder %s13, 0
      %p33 = por %p31, %p32
      %p34 = scmp.ne.s32.totalorder %s23, %s26
      %p35 = scmp.eq.s32.totalorder %s18, 1
      %p36 = por %p34, %p35
      %p37 = scmp.ne.s32.totalorder %s26, %s27
      %p38 = scmp.eq.s32.totalorder %s18, 0
      %p39 = por %p37, %p38
      %p40 = scmp.ne.s32.totalorder %s26, %s27
      %p41 = scmp.eq.s32.totalorder %s19, 1
      %p42 = por %p40, %p41
      %p44 = scmp.ne.s32.totalorder %s27, %s43
      %p45 = scmp.eq.s32.totalorder %s19, 0
      %p46 = por %p44, %p45
      %s48 = sadd.s32 %s47, 1
      %p51 = scmp.eq.s32.totalorder %s13, 1
      %p52 = scmp.ne.s32.totalorder %s47, %s49
      %p53 = scmp.eq.s32.totalorder %s13, 0
      %p54 = por %p52, %p53
      %p55 = scmp.ne.s32.totalorder %s47, %s49
      %p56 = scmp.eq.s32.totalorder %s18, 1
      %p57 = por %p55, %p56
      %p58 = scmp.ne.s32.totalorder %s49, %s50
      %p59 = scmp.eq.s32.totalorder %s18, 0
      %p60 = por %p58, %p59
      %p61 = scmp.ne.s32.totalorder %s49, %s50
      %p62 = scmp.eq.s32.totalorder %s19, 1
      %p63 = por %p61, %p62
      %p65 = scmp.ne.s32.totalorder %s50, %s64
      %p66 = scmp.eq.s32.totalorder %s19, 0
      %p67 = por %p65, %p66
      %s69 = sadd.s32 %s68, 1
      %p72 = scmp.eq.s32.totalorder %s13, 1
      %p73 = scmp.ne.s32.totalorder %s68, %s70
      %p74 = scmp.eq.s32.totalorder %s13, 0
      %p75 = por %p73, %p74
      %p76 = scmp.ne.s32.totalorder %s68, %s70
      %p77 = scmp.eq.s32.totalorder %s18, 1
      %p78 = por %p76, %p77
      %p79 = scmp.ne.s32.totalorder %s70, %s71
      %p80 = scmp.eq.s32.totalorder %s18, 0
      %p81 = por %p79, %p80
      %p82 = scmp.ne.s32.totalorder %s70, %s71
      %p83 = scmp.eq.s32.totalorder %s19, 1
      %p84 = por %p82, %p83
      %p86 = scmp.ne.s32.totalorder %s71, %s85
      %p87 = scmp.eq.s32.totalorder %s19, 0
      %p88 = por %p86, %p87
      %s90 = sadd.s32 %s89, 1
      %p93 = scmp.eq.s32.totalorder %s13, 1
      %p94 = scmp.ne.s32.totalorder %s89, %s91
      %p95 = scmp.eq.s32.totalorder %s13, 0
      %p96 = por %p94, %p95
      %p97 = scmp.ne.s32.totalorder %s89, %s91
      %p98 = scmp.eq.s32.totalorder %s18, 1
      %p99 = por %p97, %p98
      %p100 = scmp.ne.s32.totalorder %s91, %s92
      %p101 = scmp.eq.s32.totalorder %s18, 0
      %p102 = por %p100, %p101
      %p103 = scmp.ne.s32.totalorder %s91, %s92
      %p104 = scmp.eq.s32.totalorder %s19, 1
      %p105 = por %p103, %p104
      %p107 = scmp.ne.s32.totalorder %s92, %s106
      %p108 = scmp.eq.s32.totalorder %s19, 0
      %p109 = por %p107, %p108
      %s110 = ssub.s32 %s13, %s20
      %p111 = scmp.eq.s32.totalorder %s110, 0
      %s113 = sadd.s32 %s112, 1
      %s114 = scalar_select %p111, %s112, %s113
      %p117 = pneg %p111
      %p118 = scmp.eq.s32.totalorder %s13, 1
      %p119 = por %p117, %p118
      %p120 = scmp.ne.s32.totalorder %s112, %s115
      %p121 = scmp.eq.s32.totalorder %s13, 0
      %p122 = por %p120, %p121
      %p123 = scmp.ne.s32.totalorder %s112, %s115
      %p124 = scmp.eq.s32.totalorder %s18, 1
      %p125 = por %p123, %p124
      %p126 = scmp.ne.s32.totalorder %s115, %s116
      %p127 = scmp.eq.s32.totalorder %s18, 0
      %p128 = por %p126, %p127
      %p129 = scmp.ne.s32.totalorder %s115, %s116
      %p130 = scmp.eq.s32.totalorder %s19, 1
      %p131 = por %p129, %p130
      %p133 = scmp.ne.s32.totalorder %s116, %s132
      %p134 = scmp.eq.s32.totalorder %s19, 0
      %p135 = por %p133, %p134
      %p136 = scmp.le.s32.totalorder 1, %s13
      %p137 = scmp.lt.s32.totalorder %s13, 3
      %p138 = pnand %p136, %p137
      %p139 = pneg %p138
      // Predicated region
      $region9: #{tpu_custom_call.1} parent=5 // pred_check
        _
      $region10: #{tpu_custom_call.1} parent=5 // pred_check_branch
        %141 = sbr.rel (%p138) target = $region12
      $region11: #{tpu_custom_call.1} parent=5 // pred_region
        %s142 = ssub.s32 %s13, 1
        // Predicated region
        $region13: #{tpu_custom_call.1} parent=11 // pred_check
          %p143 = pneg %p60
        $region14: #{tpu_custom_call.1} parent=11 // pred_check_branch
          %145 = sbr.rel (%p143) target = $region16
        $region15: #{tpu_custom_call.1} parent=11 // pred_region
          _
        $region16: #{tpu_custom_call.1} parent=11 // pred_fallthru
          _
        // Predicated region
        $region17: #{tpu_custom_call.1} parent=11 // pred_check
          %p146 = pneg %p81
        $region18: #{tpu_custom_call.1} parent=11 // pred_check_branch
          %148 = sbr.rel (%p146) target = $region20
        $region19: #{tpu_custom_call.1} parent=11 // pred_region
          _
        $region20: #{tpu_custom_call.1} parent=11 // pred_fallthru
          _
        // Predicated region
        $region21: #{tpu_custom_call.1} parent=11 // pred_check
          %p149 = pneg %p102
        $region22: #{tpu_custom_call.1} parent=11 // pred_check_branch
          %151 = sbr.rel (%p149) target = $region24
        $region23: #{tpu_custom_call.1} parent=11 // pred_region
          _
        $region24: #{tpu_custom_call.1} parent=11 // pred_fallthru
          _
      $region12: #{tpu_custom_call.1} parent=5 // pred_fallthru
        _
      %p152 = scmp.lt.s32.totalorder %s13, 2
      // Predicated region
      $region25: #{tpu_custom_call.1} parent=5 // pred_check
        %p153 = pneg %p152
      $region26: #{tpu_custom_call.1} parent=5 // pred_check_branch
        %155 = sbr.rel (%p153) target = $region28
      $region27: #{tpu_custom_call.1} parent=5 // pred_region
        // Predicated region
        $region29: #{tpu_custom_call.1} parent=27 // pred_check
          %p156 = pneg %p33
        $region30: #{tpu_custom_call.1} parent=27 // pred_check_branch
          %158 = sbr.rel (%p156) target = $region32
        $region31: #{tpu_custom_call.1} parent=27 // pred_region
          %s159 = smul.u32 16, %s13
          %p160 = scmp.lt.s32.totalorder %s159, 31
          %s161 = scalar_select %p160, %s159, 31
          %s162 = smul.addr %s161, 8
          %s163 = scalar_lea.vmem %s0, %s162
          %s164 = smul.u32 16, %s13
        $region32: #{tpu_custom_call.1} parent=27 // pred_fallthru
          _
      $region28: #{tpu_custom_call.1} parent=5 // pred_fallthru
        _
      %p165 = scmp.le.s32.totalorder 1, %s13
      %p166 = scmp.lt.s32.totalorder %s13, 3
      %p167 = pnand %p165, %p166
      %p168 = pneg %p167
      // Predicated region
      $region33: #{tpu_custom_call.1} parent=5 // pred_check
        _
      $region34: #{tpu_custom_call.1} parent=5 // pred_check_branch
        %170 = sbr.rel (%p167) target = $region36
      $region35: #{tpu_custom_call.1} parent=5 // pred_region
        %s171 = ssub.s32 %s13, 1
        %s172 = smul.u32 16, %s18
        %p173 = scmp.lt.s32.totalorder %s172, 31
        %s174 = scalar_select %p173, %s172, 31
        %s175 = smul.addr %s174, 8
        %s176 = scalar_lea.vmem %s0, %s175
        %p177 = pneg %p39
        %p178 = pneg %p36
        %p179 = pneg %p60
        %p180 = pneg %p57
        %p181 = pneg %p81
        %p182 = pneg %p78
        %p183 = pneg %p102
        %p184 = pneg %p99
        %p185 = pneg %p128
        %p186 = pneg %p125
        %s187 = sand.u32 %s115, 1
        %s188 = scalar_lea.sflag [#allocation3], %s187
        %s189 = sand.u32 %s115, 1
        %s190 = smul.addr %s189, 16
        %s191 = scalar_lea.vmem [#allocation2], %s190
        %s192 = smul.u32 16, %s18
        %p193 = scmp.lt.s32.totalorder %s192, 31
        %s194 = scalar_select %p193, %s192, 31
        %s195 = smul.addr %s194, 8
        %s196 = scalar_lea.vmem %s0, %s195
        %s197 = smul.u32 16, %s18
        %s198 = smul.u32 2, %s18
        %v199 = vld [vmem:[%s1] sm:$0xff]
        %v200 = vld [vmem:[%s1 + $0x8] sm:$0xff]
        %v201 = vld [vmem:[%s1 + $0x10] sm:$0x3]
        %v202 = vld [vmem:[%s2] sm:$0xff]
        %v203 = vld [vmem:[%s2 + $0x8] sm:$0xff]
        %v204 = vld [vmem:[%s2 + $0x10] sm:$0xff]
        %v205 = vld [vmem:[%s2 + $0x18] sm:$0xff]
        %v206 = vld [vmem:[%s3] sm:$0x1]
        %s207 = smul.u32 0, 8
        %s208 = scalar_lea.vmem %s196, %s207
        %v209 = vld [vmem:[%s208] sm:$0xff]
        %v210 = vld [vmem:[%s208 + $0x8] sm:$0xff]
        %v211 = vld [vmem:[%s208 + $0x10] sm:$0xff]
        %v212 = vld [vmem:[%s208 + $0x18] sm:$0xff]
        %v213 = vld [vmem:[%s208 + $0x20] sm:$0xff]
        %v214 = vld [vmem:[%s208 + $0x28] sm:$0xff]
        %v215 = vld [vmem:[%s208 + $0x30] sm:$0xff]
        %v216 = vld [vmem:[%s208 + $0x38] sm:$0xff]
        %v217 = vld [vmem:[%s208 + $0x40] sm:$0xff]
        %v218 = vld [vmem:[%s208 + $0x48] sm:$0xff]
        %v219 = vld [vmem:[%s208 + $0x50] sm:$0xff]
        %v220 = vld [vmem:[%s208 + $0x58] sm:$0xff]
        %v221 = vld [vmem:[%s208 + $0x60] sm:$0xff]
        %v222 = vld [vmem:[%s208 + $0x68] sm:$0xff]
        %v223 = vld [vmem:[%s208 + $0x70] sm:$0xff]
        %v224 = vld [vmem:[%s208 + $0x78] sm:$0xff]
        %vm225 = vcmask 146432
        %v227 = vsel %vm225, %v209, 0
        %v230 = vsel %vm225, %v210, 0
        %v233 = vsel %vm225, %v211, 0
        %v236 = vsel %vm225, %v212, 0
        %v239 = vsel %vm225, %v213, 0
        %v242 = vsel %vm225, %v214, 0
        %v245 = vsel %vm225, %v215, 0
        %v248 = vsel %vm225, %v216, 0
        %v251 = vsel %vm225, %v217, 0
        %v254 = vsel %vm225, %v218, 0
        %v257 = vsel %vm225, %v219, 0
        %v260 = vsel %vm225, %v220, 0
        %v263 = vsel %vm225, %v221, 0
        %v266 = vsel %vm225, %v222, 0
        %v269 = vsel %vm225, %v223, 0
        %v272 = vsel %vm225, %v224, 0
        %vm274 = vcmask 1041408
        %v276 = vsel %vm274, %v201, 0
        %278 = vmatprep.subr.mxu0 0.0
        %279 = vmatpush1.msra.mxu0 0.0
        %280 = vmatprep.subr.mxu0 0.0
        %281 = vmatpush1.msra.mxu0 0.0
        %282 = vmatprep.subr.mxu0 0.0
        %283 = vmatpush1.msra.mxu0 0.0
        %284 = vmatprep.subr.mxu0 0.0
        %285 = vmatpush1.msra.mxu0 0.0
        %286 = vmatprep.subr.mxu0 0.0
        %287 = vmatpush1.msra.mxu0 0.0
        %288 = vmatprep.subr.mxu0 0.0
        %289 = vmatpush1.msra.mxu0 0.0
        %290 = vmatprep.subr.mxu0 0.0
        %291 = vmatpush1.msra.mxu0 0.0
        %292 = vmatprep.subr.mxu0 0.0
        %293 = vmatpush1.msra.mxu0 0.0
        %294 = vmatprep.subr.mxu0 0.0
        %295 = vmatpush1.msra.mxu0 0.0
        %296 = vmatprep.subr.mxu0 0.0
        %297 = vmatpush1.msra.mxu0 0.0
        %298 = vmatprep.subr.mxu0 0.0
        %299 = vmatpush1.msra.mxu0 0.0
        %300 = vmatprep.subr.mxu0 0.0
        %301 = vmatpush1.msra.mxu0 0.0
        %302 = vmatprep.subr.mxu0 0.0
        %303 = vmatpush1.msra.mxu0 0.0
        %304 = vmatprep.subr.mxu0 0.0
        %305 = vmatpush1.msra.mxu0 %v276
        %306 = vmatprep.subr.mxu0 0.0
        %307 = vmatpush1.msra.mxu0 %v200
        %308 = vmatprep.subr.mxu0 0.0
        %309 = vmatpush1.msra.mxu0 %v199
        %310 = vmatprep.subr.mxu0 0.0
        %311 = vmatpush2.msra.mxu0 0.0
        %312 = vmatprep.subr.mxu0 0.0
        %313 = vmatpush2.msra.mxu0 0.0
        %314 = vmatprep.subr.mxu0 0.0
        %315 = vmatpush2.msra.mxu0 0.0
        %316 = vmatprep.subr.mxu0 0.0
        %317 = vmatpush2.msra.mxu0 0.0
        %318 = vmatprep.subr.mxu0 0.0
        %319 = vmatpush2.msra.mxu0 0.0
        %320 = vmatprep.subr.mxu0 0.0
        %321 = vmatpush2.msra.mxu0 0.0
        %322 = vmatprep.subr.mxu0 0.0
        %323 = vmatpush2.msra.mxu0 0.0
        %324 = vmatprep.subr.mxu0 0.0
        %325 = vmatpush2.msra.mxu0 0.0
        %326 = vmatprep.subr.mxu0 0.0
        %327 = vmatpush2.msra.mxu0 0.0
        %328 = vmatprep.subr.mxu0 0.0
        %329 = vmatpush2.msra.mxu0 0.0
        %330 = vmatprep.subr.mxu0 0.0
        %331 = vmatpush2.msra.mxu0 0.0
        %332 = vmatprep.subr.mxu0 0.0
        %333 = vmatpush2.msra.mxu0 0.0
        %334 = vmatprep.subr.mxu0 0.0
        %335 = vmatpush2.msra.mxu0 0.0
        %336 = vmatprep.subr.mxu0 0.0
        %337 = vmatpush2.msra.mxu0 0.0
        %338 = vmatprep.subr.mxu0 0.0
        %339 = vmatpush2.msra.mxu0 0.0
        %340 = vmatprep.subr.mxu0 0.0
        %341 = vmatpush2.msra.mxu0 0.0
        %342 = vmatprep.mubr.f32.mxu0 0.0
        %343 = vmatmul.mubr.f32.gmra.mxu0 %v227
        %v344 = vpop.f32.mrf.mxu0
        %v345 = vadd.f32 0.0, %v344
        %v346 = vpop.f32.mrf.mxu0
        %347 = vmatprep.mubr.f32.mxu0 0.0
        %348 = vmatmul.mubr.f32.gmra.mxu0 %v230
        %v349 = vpop.f32.mrf.mxu0
        %v350 = vadd.f32 0.0, %v349
        %v351 = vpop.f32.mrf.mxu0
        %352 = vmatprep.mubr.f32.mxu0 0.0
        %353 = vmatmul.mubr.f32.gmra.mxu0 %v233
        %v354 = vpop.f32.mrf.mxu0
        %v355 = vadd.f32 0.0, %v354
        %v356 = vpop.f32.mrf.mxu0
        %357 = vmatprep.mubr.f32.mxu0 0.0
        %358 = vmatmul.mubr.f32.gmra.mxu0 %v236
        %v359 = vpop.f32.mrf.mxu0
        %v360 = vadd.f32 0.0, %v359
        %v361 = vpop.f32.mrf.mxu0
        %362 = vmatprep.mubr.f32.mxu0 0.0
        %363 = vmatmul.mubr.f32.gmra.mxu0 %v239
        %v364 = vpop.f32.mrf.mxu0
        %v365 = vadd.f32 0.0, %v364
        %v366 = vpop.f32.mrf.mxu0
        %367 = vmatprep.mubr.f32.mxu0 0.0
        %368 = vmatmul.mubr.f32.gmra.mxu0 %v242
        %v369 = vpop.f32.mrf.mxu0
        %v370 = vadd.f32 0.0, %v369
        %v371 = vpop.f32.mrf.mxu0
        %372 = vmatprep.mubr.f32.mxu0 0.0
        %373 = vmatmul.mubr.f32.gmra.mxu0 %v245
        %v374 = vpop.f32.mrf.mxu0
        %v375 = vadd.f32 0.0, %v374
        %v376 = vpop.f32.mrf.mxu0
        %377 = vmatprep.mubr.f32.mxu0 0.0
        %378 = vmatmul.mubr.f32.gmra.mxu0 %v248
        %v379 = vpop.f32.mrf.mxu0
        %v380 = vadd.f32 0.0, %v379
        %v381 = vpop.f32.mrf.mxu0
        %382 = vmatprep.mubr.f32.mxu0 0.0
        %383 = vmatmul.mubr.f32.gmra.mxu0 %v251
        %v384 = vpop.f32.mrf.mxu0
        %v385 = vadd.f32 0.0, %v384
        %v386 = vpop.f32.mrf.mxu0
        %387 = vmatprep.mubr.f32.mxu0 0.0
        %388 = vmatmul.mubr.f32.gmra.mxu0 %v254
        %v389 = vpop.f32.mrf.mxu0
        %v390 = vadd.f32 0.0, %v389
        %v391 = vpop.f32.mrf.mxu0
        %392 = vmatprep.mubr.f32.mxu0 0.0
        %393 = vmatmul.mubr.f32.gmra.mxu0 %v257
        %v394 = vpop.f32.mrf.mxu0
        %v395 = vadd.f32 0.0, %v394
        %v396 = vpop.f32.mrf.mxu0
        %397 = vmatprep.mubr.f32.mxu0 0.0
        %398 = vmatmul.mubr.f32.gmra.mxu0 %v260
        %v399 = vpop.f32.mrf.mxu0
        %v400 = vadd.f32 0.0, %v399
        %v401 = vpop.f32.mrf.mxu0
        %402 = vmatprep.mubr.f32.mxu0 0.0
        %403 = vmatmul.mubr.f32.gmra.mxu0 %v263
        %v404 = vpop.f32.mrf.mxu0
        %v405 = vadd.f32 0.0, %v404
        %v406 = vpop.f32.mrf.mxu0
        %407 = vmatprep.mubr.f32.mxu0 0.0
        %408 = vmatmul.mubr.f32.gmra.mxu0 %v266
        %v409 = vpop.f32.mrf.mxu0
        %v410 = vadd.f32 0.0, %v409
        %v411 = vpop.f32.mrf.mxu0
        %412 = vmatprep.mubr.f32.mxu0 0.0
        %413 = vmatmul.mubr.f32.gmra.mxu0 %v269
        %v414 = vpop.f32.mrf.mxu0
        %v415 = vadd.f32 0.0, %v414
        %v416 = vpop.f32.mrf.mxu0
        %417 = vmatprep.mubr.f32.mxu0 0.0
        %418 = vmatmul.mubr.f32.gmra.mxu0 %v272
        %v419 = vpop.f32.mrf.mxu0
        %v420 = vadd.f32 0.0, %v419
        %v421 = vpop.f32.mrf.mxu0
        %422 = vdwg.mxu0
        %439 = vrot.lane.b32.xlu0 %v345, 96
        %v440 = vpop.permute.xlu0 %439
        %441 = vrot.lane.b32.xlu0 %v350, 96
        %v442 = vpop.permute.xlu0 %441
        %443 = vrot.lane.b32.xlu0 %v355, 96
        %v444 = vpop.permute.xlu0 %443
        %445 = vrot.lane.b32.xlu0 %v360, 96
        %v446 = vpop.permute.xlu0 %445
        %447 = vrot.lane.b32.xlu0 %v365, 96
        %v448 = vpop.permute.xlu0 %447
        %449 = vrot.lane.b32.xlu0 %v370, 96
        %v450 = vpop.permute.xlu0 %449
        %451 = vrot.lane.b32.xlu0 %v375, 96
        %v452 = vpop.permute.xlu0 %451
        %453 = vrot.lane.b32.xlu0 %v380, 96
        %v454 = vpop.permute.xlu0 %453
        %455 = vrot.lane.b32.xlu0 %v385, 96
        %v456 = vpop.permute.xlu0 %455
        %457 = vrot.lane.b32.xlu0 %v390, 96
        %v458 = vpop.permute.xlu0 %457
        %459 = vrot.lane.b32.xlu0 %v395, 96
        %v460 = vpop.permute.xlu0 %459
        %461 = vrot.lane.b32.xlu0 %v400, 96
        %v462 = vpop.permute.xlu0 %461
        %463 = vrot.lane.b32.xlu0 %v405, 96
        %v464 = vpop.permute.xlu0 %463
        %465 = vrot.lane.b32.xlu0 %v410, 96
        %v466 = vpop.permute.xlu0 %465
        %467 = vrot.lane.b32.xlu0 %v415, 96
        %v468 = vpop.permute.xlu0 %467
        %469 = vrot.lane.b32.xlu0 %v420, 96
        %v470 = vpop.permute.xlu0 %469
        %vm471 = vcmask 261120
        %v472 = vsel %vm471, %v440, 0
        %v474 = vsel %vm471, %v442, 0
        %v476 = vsel %vm471, %v444, 0
        %v478 = vsel %vm471, %v446, 0
        %v480 = vsel %vm471, %v448, 0
        %v482 = vsel %vm471, %v450, 0
        %v484 = vsel %vm471, %v452, 0
        %v486 = vsel %vm471, %v454, 0
        %v488 = vsel %vm471, %v456, 0
        %v490 = vsel %vm471, %v458, 0
        %v492 = vsel %vm471, %v460, 0
        %v494 = vsel %vm471, %v462, 0
        %v496 = vsel %vm471, %v464, 0
        %v498 = vsel %vm471, %v466, 0
        %v500 = vsel %vm471, %v468, 0
        %v502 = vsel %vm471, %v470, 0
        %v504 = vsel %vm471, %v345, 0
        %v506 = vsel %vm471, %v350, 0
        %v508 = vsel %vm471, %v355, 0
        %v510 = vsel %vm471, %v360, 0
        %v512 = vsel %vm471, %v365, 0
        %v514 = vsel %vm471, %v370, 0
        %v516 = vsel %vm471, %v375, 0
        %v518 = vsel %vm471, %v380, 0
        %v520 = vsel %vm471, %v385, 0
        %v522 = vsel %vm471, %v390, 0
        %v524 = vsel %vm471, %v395, 0
        %v526 = vsel %vm471, %v400, 0
        %v528 = vsel %vm471, %v405, 0
        %v530 = vsel %vm471, %v410, 0
        %v532 = vsel %vm471, %v415, 0
        %v534 = vsel %vm471, %v420, 0
        %536 = vmatprep.subr.mxu0 0.0
        %537 = vmatpush1.xpose.msra.mxu0 %v534
        %538 = vmatprep.subr.mxu0 0.0
        %539 = vmatpush1.xpose.msra.mxu0 %v532
        %540 = vmatprep.subr.mxu0 0.0
        %541 = vmatpush1.xpose.msra.mxu0 %v530
        %542 = vmatprep.subr.mxu0 0.0
        %543 = vmatpush1.xpose.msra.mxu0 %v528
        %544 = vmatprep.subr.mxu0 0.0
        %545 = vmatpush1.xpose.msra.mxu0 %v526
        %546 = vmatprep.subr.mxu0 0.0
        %547 = vmatpush1.xpose.msra.mxu0 %v524
        %548 = vmatprep.subr.mxu0 0.0
        %549 = vmatpush1.xpose.msra.mxu0 %v522
        %550 = vmatprep.subr.mxu0 0.0
        %551 = vmatpush1.xpose.msra.mxu0 %v520
        %552 = vmatprep.subr.mxu0 0.0
        %553 = vmatpush1.xpose.msra.mxu0 %v518
        %554 = vmatprep.subr.mxu0 0.0
        %555 = vmatpush1.xpose.msra.mxu0 %v516
        %556 = vmatprep.subr.mxu0 0.0
        %557 = vmatpush1.xpose.msra.mxu0 %v514
        %558 = vmatprep.subr.mxu0 0.0
        %559 = vmatpush1.xpose.msra.mxu0 %v512
        %560 = vmatprep.subr.mxu0 0.0
        %561 = vmatpush1.xpose.msra.mxu0 %v510
        %562 = vmatprep.subr.mxu0 0.0
        %563 = vmatpush1.xpose.msra.mxu0 %v508
        %564 = vmatprep.subr.mxu0 0.0
        %565 = vmatpush1.xpose.msra.mxu0 %v506
        %566 = vmatprep.subr.mxu0 0.0
        %567 = vmatpush1.xpose.msra.mxu0 %v504
        %568 = vmatprep.subr.mxu0 0.0
        %569 = vmatpush2.xpose.msra.mxu0 0.0
        %570 = vmatprep.subr.mxu0 0.0
        %571 = vmatpush2.xpose.msra.mxu0 0.0
        %572 = vmatprep.subr.mxu0 0.0
        %573 = vmatpush2.xpose.msra.mxu0 0.0
        %574 = vmatprep.subr.mxu0 0.0
        %575 = vmatpush2.xpose.msra.mxu0 0.0
        %576 = vmatprep.subr.mxu0 0.0
        %577 = vmatpush2.xpose.msra.mxu0 0.0
        %578 = vmatprep.subr.mxu0 0.0
        %579 = vmatpush2.xpose.msra.mxu0 0.0
        %580 = vmatprep.subr.mxu0 0.0
        %581 = vmatpush2.xpose.msra.mxu0 0.0
        %582 = vmatprep.subr.mxu0 0.0
        %583 = vmatpush2.xpose.msra.mxu0 0.0
        %584 = vmatprep.subr.mxu0 0.0
        %585 = vmatpush2.xpose.msra.mxu0 0.0
        %586 = vmatprep.subr.mxu0 0.0
        %587 = vmatpush2.xpose.msra.mxu0 0.0
        %588 = vmatprep.subr.mxu0 0.0
        %589 = vmatpush2.xpose.msra.mxu0 0.0
        %590 = vmatprep.subr.mxu0 0.0
        %591 = vmatpush2.xpose.msra.mxu0 0.0
        %592 = vmatprep.subr.mxu0 0.0
        %593 = vmatpush2.xpose.msra.mxu0 0.0
        %594 = vmatprep.subr.mxu0 0.0
        %595 = vmatpush2.xpose.msra.mxu0 0.0
        %596 = vmatprep.subr.mxu0 0.0
        %597 = vmatpush2.xpose.msra.mxu0 0.0
        %598 = vmatprep.subr.mxu0 0.0
        %599 = vmatpush2.xpose.msra.mxu0 0.0
        %600 = vmatprep.mubr.f32.mxu0 0.0
        %601 = vmatmul.mubr.f32.gmra.mxu0 %v472
        %v602 = vpop.f32.mrf.mxu0
        %v603 = vadd.f32 0.0, %v602
        %v604 = vpop.f32.mrf.mxu0
        %605 = vmatprep.mubr.f32.mxu0 0.0
        %606 = vmatmul.mubr.f32.gmra.mxu0 %v474
        %v607 = vpop.f32.mrf.mxu0
        %v608 = vadd.f32 0.0, %v607
        %v609 = vpop.f32.mrf.mxu0
        %610 = vmatprep.mubr.f32.mxu0 0.0
        %611 = vmatmul.mubr.f32.gmra.mxu0 %v476
        %v612 = vpop.f32.mrf.mxu0
        %v613 = vadd.f32 0.0, %v612
        %v614 = vpop.f32.mrf.mxu0
        %615 = vmatprep.mubr.f32.mxu0 0.0
        %616 = vmatmul.mubr.f32.gmra.mxu0 %v478
        %v617 = vpop.f32.mrf.mxu0
        %v618 = vadd.f32 0.0, %v617
        %v619 = vpop.f32.mrf.mxu0
        %620 = vmatprep.mubr.f32.mxu0 0.0
        %621 = vmatmul.mubr.f32.gmra.mxu0 %v480
        %v622 = vpop.f32.mrf.mxu0
        %v623 = vadd.f32 0.0, %v622
        %v624 = vpop.f32.mrf.mxu0
        %625 = vmatprep.mubr.f32.mxu0 0.0
        %626 = vmatmul.mubr.f32.gmra.mxu0 %v482
        %v627 = vpop.f32.mrf.mxu0
        %v628 = vadd.f32 0.0, %v627
        %v629 = vpop.f32.mrf.mxu0
        %630 = vmatprep.mubr.f32.mxu0 0.0
        %631 = vmatmul.mubr.f32.gmra.mxu0 %v484
        %v632 = vpop.f32.mrf.mxu0
        %v633 = vadd.f32 0.0, %v632
        %v634 = vpop.f32.mrf.mxu0
        %635 = vmatprep.mubr.f32.mxu0 0.0
        %636 = vmatmul.mubr.f32.gmra.mxu0 %v486
        %v637 = vpop.f32.mrf.mxu0
        %v638 = vadd.f32 0.0, %v637
        %v639 = vpop.f32.mrf.mxu0
        %640 = vmatprep.mubr.f32.mxu0 0.0
        %641 = vmatmul.mubr.f32.gmra.mxu0 %v488
        %v642 = vpop.f32.mrf.mxu0
        %v643 = vadd.f32 0.0, %v642
        %v644 = vpop.f32.mrf.mxu0
        %645 = vmatprep.mubr.f32.mxu0 0.0
        %646 = vmatmul.mubr.f32.gmra.mxu0 %v490
        %v647 = vpop.f32.mrf.mxu0
        %v648 = vadd.f32 0.0, %v647
        %v649 = vpop.f32.mrf.mxu0
        %650 = vmatprep.mubr.f32.mxu0 0.0
        %651 = vmatmul.mubr.f32.gmra.mxu0 %v492
        %v652 = vpop.f32.mrf.mxu0
        %v653 = vadd.f32 0.0, %v652
        %v654 = vpop.f32.mrf.mxu0
        %655 = vmatprep.mubr.f32.mxu0 0.0
        %656 = vmatmul.mubr.f32.gmra.mxu0 %v494
        %v657 = vpop.f32.mrf.mxu0
        %v658 = vadd.f32 0.0, %v657
        %v659 = vpop.f32.mrf.mxu0
        %660 = vmatprep.mubr.f32.mxu0 0.0
        %661 = vmatmul.mubr.f32.gmra.mxu0 %v496
        %v662 = vpop.f32.mrf.mxu0
        %v663 = vadd.f32 0.0, %v662
        %v664 = vpop.f32.mrf.mxu0
        %665 = vmatprep.mubr.f32.mxu0 0.0
        %666 = vmatmul.mubr.f32.gmra.mxu0 %v498
        %v667 = vpop.f32.mrf.mxu0
        %v668 = vadd.f32 0.0, %v667
        %v669 = vpop.f32.mrf.mxu0
        %670 = vmatprep.mubr.f32.mxu0 0.0
        %671 = vmatmul.mubr.f32.gmra.mxu0 %v500
        %v672 = vpop.f32.mrf.mxu0
        %v673 = vadd.f32 0.0, %v672
        %v674 = vpop.f32.mrf.mxu0
        %675 = vmatprep.mubr.f32.mxu0 0.0
        %676 = vmatmul.mubr.f32.gmra.mxu0 %v502
        %v677 = vpop.f32.mrf.mxu0
        %v678 = vadd.f32 0.0, %v677
        %v679 = vpop.f32.mrf.mxu0
        %680 = vdwg.mxu0
        %681 = vrot.lane.b32.xlu0 %v209, 112
        %v682 = vpop.permute.xlu0 %681
        %683 = vrot.lane.b32.xlu0 %v210, 112
        %v684 = vpop.permute.xlu0 %683
        %685 = vrot.lane.b32.xlu0 %v211, 112
        %v686 = vpop.permute.xlu0 %685
        %687 = vrot.lane.b32.xlu0 %v212, 112
        %v688 = vpop.permute.xlu0 %687
        %689 = vrot.lane.b32.xlu0 %v213, 112
        %v690 = vpop.permute.xlu0 %689
        %691 = vrot.lane.b32.xlu0 %v214, 112
        %v692 = vpop.permute.xlu0 %691
        %693 = vrot.lane.b32.xlu0 %v215, 112
        %v694 = vpop.permute.xlu0 %693
        %695 = vrot.lane.b32.xlu0 %v216, 112
        %v696 = vpop.permute.xlu0 %695
        %697 = vrot.lane.b32.xlu0 %v217, 112
        %v698 = vpop.permute.xlu0 %697
        %699 = vrot.lane.b32.xlu0 %v218, 112
        %v700 = vpop.permute.xlu0 %699
        %701 = vrot.lane.b32.xlu0 %v219, 112
        %v702 = vpop.permute.xlu0 %701
        %703 = vrot.lane.b32.xlu0 %v220, 112
        %v704 = vpop.permute.xlu0 %703
        %705 = vrot.lane.b32.xlu0 %v221, 112
        %v706 = vpop.permute.xlu0 %705
        %707 = vrot.lane.b32.xlu0 %v222, 112
        %v708 = vpop.permute.xlu0 %707
        %709 = vrot.lane.b32.xlu0 %v223, 112
        %v710 = vpop.permute.xlu0 %709
        %711 = vrot.lane.b32.xlu0 %v224, 112
        %v712 = vpop.permute.xlu0 %711
        %729 = vxpose.xlu0.b32.start [1/16] %v682, 128
        %730 = vxpose.xlu0.b32.cont [2/16] %v684, 128
        %731 = vxpose.xlu0.b32.cont [3/16] %v686, 128
        %732 = vxpose.xlu0.b32.cont [4/16] %v688, 128
        %733 = vxpose.xlu0.b32.cont [5/16] %v690, 128
        %734 = vxpose.xlu0.b32.cont [6/16] %v692, 128
        %735 = vxpose.xlu0.b32.cont [7/16] %v694, 128
        %736 = vxpose.xlu0.b32.cont [8/16] %v696, 128
        %737 = vxpose.xlu0.b32.cont [9/16] %v698, 128
        %738 = vxpose.xlu0.b32.cont [10/16] %v700, 128
        %739 = vxpose.xlu0.b32.cont [11/16] %v702, 128
        %740 = vxpose.xlu0.b32.cont [12/16] %v704, 128
        %741 = vxpose.xlu0.b32.cont [13/16] %v706, 128
        %742 = vxpose.xlu0.b32.cont [14/16] %v708, 128
        %743 = vxpose.xlu0.b32.cont [15/16] %v710, 128
        %744 = vxpose.xlu0.b32.end [16/16] %v712, 128
        %v745 = vpop.trf.xlu0
        %v746 = vpop.trf.xlu0
        %v747 = vpop.trf.xlu0
        %v748 = vpop.trf.xlu0
        %v749 = vpop.trf.xlu0
        %v750 = vpop.trf.xlu0
        %v751 = vpop.trf.xlu0
        %v752 = vpop.trf.xlu0
        %v753 = vpop.trf.xlu0
        %v754 = vpop.trf.xlu0
        %v755 = vpop.trf.xlu0
        %v756 = vpop.trf.xlu0
        %v757 = vpop.trf.xlu0
        %v758 = vpop.trf.xlu0
        %v759 = vpop.trf.xlu0
        %v760 = vpop.trf.xlu0
        %v761 = vlaneseq
        %v762 = vshrl.u32 %v761, 7
        %v763 = vsub.s32 0, %v762
        %v764 = vrot.slane %v745, %v763
        %765 = vset.pattern.permute.xlu0 16
        %766 = vperm.xlu0 %765, %v209
        %v767 = vpop.permute.xlu0 %766
        %769 = vset.pattern.permute.xlu0 16
        %770 = vperm.xlu0 %769, %v210
        %v771 = vpop.permute.xlu0 %770
        %773 = vset.pattern.permute.xlu0 16
        %774 = vperm.xlu0 %773, %v211
        %v775 = vpop.permute.xlu0 %774
        %777 = vset.pattern.permute.xlu0 16
        %778 = vperm.xlu0 %777, %v212
        %v779 = vpop.permute.xlu0 %778
        %781 = vset.pattern.permute.xlu0 16
        %782 = vperm.xlu0 %781, %v213
        %v783 = vpop.permute.xlu0 %782
        %785 = vset.pattern.permute.xlu0 16
        %786 = vperm.xlu0 %785, %v214
        %v787 = vpop.permute.xlu0 %786
        %789 = vset.pattern.permute.xlu0 16
        %790 = vperm.xlu0 %789, %v215
        %v791 = vpop.permute.xlu0 %790
        %793 = vset.pattern.permute.xlu0 16
        %794 = vperm.xlu0 %793, %v216
        %v795 = vpop.permute.xlu0 %794
        %797 = vset.pattern.permute.xlu0 16
        %798 = vperm.xlu0 %797, %v217
        %v799 = vpop.permute.xlu0 %798
        %801 = vset.pattern.permute.xlu0 16
        %802 = vperm.xlu0 %801, %v218
        %v803 = vpop.permute.xlu0 %802
        %805 = vset.pattern.permute.xlu0 16
        %806 = vperm.xlu0 %805, %v219
        %v807 = vpop.permute.xlu0 %806
        %809 = vset.pattern.permute.xlu0 16
        %810 = vperm.xlu0 %809, %v220
        %v811 = vpop.permute.xlu0 %810
        %813 = vset.pattern.permute.xlu0 16
        %814 = vperm.xlu0 %813, %v221
        %v815 = vpop.permute.xlu0 %814
        %817 = vset.pattern.permute.xlu0 16
        %818 = vperm.xlu0 %817, %v222
        %v819 = vpop.permute.xlu0 %818
        %821 = vset.pattern.permute.xlu0 16
        %822 = vperm.xlu0 %821, %v223
        %v823 = vpop.permute.xlu0 %822
        %825 = vset.pattern.permute.xlu0 16
        %826 = vperm.xlu0 %825, %v224
        %v827 = vpop.permute.xlu0 %826
        %v829 = vsub.f32 %v764, %v767
        %v830 = vsub.f32 %v764, %v771
        %v831 = vsub.f32 %v764, %v775
        %v832 = vsub.f32 %v764, %v779
        %v833 = vsub.f32 %v764, %v783
        %v834 = vsub.f32 %v764, %v787
        %v835 = vsub.f32 %v764, %v791
        %v836 = vsub.f32 %v764, %v795
        %v837 = vsub.f32 %v764, %v799
        %v838 = vsub.f32 %v764, %v803
        %v839 = vsub.f32 %v764, %v807
        %v840 = vsub.f32 %v764, %v811
        %v841 = vsub.f32 %v764, %v815
        %v842 = vsub.f32 %v764, %v819
        %v843 = vsub.f32 %v764, %v823
        %v844 = vsub.f32 %v764, %v827
        %vm845 = vcmp.ge.f32.partialorder %v829, -2.0
        %vm846 = vcmp.ge.f32.partialorder %v830, -2.0
        %vm847 = vcmp.ge.f32.partialorder %v831, -2.0
        %vm848 = vcmp.ge.f32.partialorder %v832, -2.0
        %vm849 = vcmp.ge.f32.partialorder %v833, -2.0
        %vm850 = vcmp.ge.f32.partialorder %v834, -2.0
        %vm851 = vcmp.ge.f32.partialorder %v835, -2.0
        %vm852 = vcmp.ge.f32.partialorder %v836, -2.0
        %vm853 = vcmp.ge.f32.partialorder %v837, -2.0
        %vm854 = vcmp.ge.f32.partialorder %v838, -2.0
        %vm855 = vcmp.ge.f32.partialorder %v839, -2.0
        %vm856 = vcmp.ge.f32.partialorder %v840, -2.0
        %vm857 = vcmp.ge.f32.partialorder %v841, -2.0
        %vm858 = vcmp.ge.f32.partialorder %v842, -2.0
        %vm859 = vcmp.ge.f32.partialorder %v843, -2.0
        %vm860 = vcmp.ge.f32.partialorder %v844, -2.0
        %vm861 = vcmp.le.f32.partialorder %v829, 3.0
        %vm862 = vcmp.le.f32.partialorder %v830, 3.0
        %vm863 = vcmp.le.f32.partialorder %v831, 3.0
        %vm864 = vcmp.le.f32.partialorder %v832, 3.0
        %vm865 = vcmp.le.f32.partialorder %v833, 3.0
        %vm866 = vcmp.le.f32.partialorder %v834, 3.0
        %vm867 = vcmp.le.f32.partialorder %v835, 3.0
        %vm868 = vcmp.le.f32.partialorder %v836, 3.0
        %vm869 = vcmp.le.f32.partialorder %v837, 3.0
        %vm870 = vcmp.le.f32.partialorder %v838, 3.0
        %vm871 = vcmp.le.f32.partialorder %v839, 3.0
        %vm872 = vcmp.le.f32.partialorder %v840, 3.0
        %vm873 = vcmp.le.f32.partialorder %v841, 3.0
        %vm874 = vcmp.le.f32.partialorder %v842, 3.0
        %vm875 = vcmp.le.f32.partialorder %v843, 3.0
        %vm876 = vcmp.le.f32.partialorder %v844, 3.0
        %vm877 = vmand %vm845, %vm861
        %vm878 = vmand %vm846, %vm862
        %vm879 = vmand %vm847, %vm863
        %vm880 = vmand %vm848, %vm864
        %vm881 = vmand %vm849, %vm865
        %vm882 = vmand %vm850, %vm866
        %vm883 = vmand %vm851, %vm867
        %vm884 = vmand %vm852, %vm868
        %vm885 = vmand %vm853, %vm869
        %vm886 = vmand %vm854, %vm870
        %vm887 = vmand %vm855, %vm871
        %vm888 = vmand %vm856, %vm872
        %vm889 = vmand %vm857, %vm873
        %vm890 = vmand %vm858, %vm874
        %vm891 = vmand %vm859, %vm875
        %vm892 = vmand %vm860, %vm876
        %v893 = vsel %vm877, %v603, -1e+30
        %v894 = vsel %vm878, %v608, -1e+30
        %v895 = vsel %vm879, %v613, -1e+30
        %v896 = vsel %vm880, %v618, -1e+30
        %v897 = vsel %vm881, %v623, -1e+30
        %v898 = vsel %vm882, %v628, -1e+30
        %v899 = vsel %vm883, %v633, -1e+30
        %v900 = vsel %vm884, %v638, -1e+30
        %v901 = vsel %vm885, %v643, -1e+30
        %v902 = vsel %vm886, %v648, -1e+30
        %v903 = vsel %vm887, %v653, -1e+30
        %v904 = vsel %vm888, %v658, -1e+30
        %v905 = vsel %vm889, %v663, -1e+30
        %v906 = vsel %vm890, %v668, -1e+30
        %v907 = vsel %vm891, %v673, -1e+30
        %v908 = vsel %vm892, %v678, -1e+30
        %909 = vmax.xlane.f32.xlu0 %v893
        %v910 = vpop.xlane.xlu0 %909
        %911 = vmax.xlane.f32.xlu0 %v894
        %v912 = vpop.xlane.xlu0 %911
        %913 = vmax.xlane.f32.xlu0 %v895
        %v914 = vpop.xlane.xlu0 %913
        %915 = vmax.xlane.f32.xlu0 %v896
        %v916 = vpop.xlane.xlu0 %915
        %917 = vmax.xlane.f32.xlu0 %v897
        %v918 = vpop.xlane.xlu0 %917
        %919 = vmax.xlane.f32.xlu0 %v898
        %v920 = vpop.xlane.xlu0 %919
        %921 = vmax.xlane.f32.xlu0 %v899
        %v922 = vpop.xlane.xlu0 %921
        %923 = vmax.xlane.f32.xlu0 %v900
        %v924 = vpop.xlane.xlu0 %923
        %925 = vmax.xlane.f32.xlu0 %v901
        %v926 = vpop.xlane.xlu0 %925
        %927 = vmax.xlane.f32.xlu0 %v902
        %v928 = vpop.xlane.xlu0 %927
        %929 = vmax.xlane.f32.xlu0 %v903
        %v930 = vpop.xlane.xlu0 %929
        %931 = vmax.xlane.f32.xlu0 %v904
        %v932 = vpop.xlane.xlu0 %931
        %933 = vmax.xlane.f32.xlu0 %v905
        %v934 = vpop.xlane.xlu0 %933
        %935 = vmax.xlane.f32.xlu0 %v906
        %v936 = vpop.xlane.xlu0 %935
        %937 = vmax.xlane.f32.xlu0 %v907
        %v938 = vpop.xlane.xlu0 %937
        %939 = vmax.xlane.f32.xlu0 %v908
        %v940 = vpop.xlane.xlu0 %939
        %v941 = vsub.f32 %v893, %v910
        %v942 = vsub.f32 %v894, %v912
        %v943 = vsub.f32 %v895, %v914
        %v944 = vsub.f32 %v896, %v916
        %v945 = vsub.f32 %v897, %v918
        %v946 = vsub.f32 %v898, %v920
        %v947 = vsub.f32 %v899, %v922
        %v948 = vsub.f32 %v900, %v924
        %v949 = vsub.f32 %v901, %v926
        %v950 = vsub.f32 %v902, %v928
        %v951 = vsub.f32 %v903, %v930
        %v952 = vsub.f32 %v904, %v932
        %v953 = vsub.f32 %v905, %v934
        %v954 = vsub.f32 %v906, %v936
        %v955 = vsub.f32 %v907, %v938
        %v956 = vsub.f32 %v908, %v940
        %v957 = vmul.f32 %v941, 1.442695
        %v958 = vpow.pop %v957
        %v959 = vmul.f32 %v942, 1.442695
        %v960 = vpow.pop %v959
        %v961 = vmul.f32 %v943, 1.442695
        %v962 = vpow.pop %v961
        %v963 = vmul.f32 %v944, 1.442695
        %v964 = vpow.pop %v963
        %v965 = vmul.f32 %v945, 1.442695
        %v966 = vpow.pop %v965
        %v967 = vmul.f32 %v946, 1.442695
        %v968 = vpow.pop %v967
        %v969 = vmul.f32 %v947, 1.442695
        %v970 = vpow.pop %v969
        %v971 = vmul.f32 %v948, 1.442695
        %v972 = vpow.pop %v971
        %v973 = vmul.f32 %v949, 1.442695
        %v974 = vpow.pop %v973
        %v975 = vmul.f32 %v950, 1.442695
        %v976 = vpow.pop %v975
        %v977 = vmul.f32 %v951, 1.442695
        %v978 = vpow.pop %v977
        %v979 = vmul.f32 %v952, 1.442695
        %v980 = vpow.pop %v979
        %v981 = vmul.f32 %v953, 1.442695
        %v982 = vpow.pop %v981
        %v983 = vmul.f32 %v954, 1.442695
        %v984 = vpow.pop %v983
        %v985 = vmul.f32 %v955, 1.442695
        %v986 = vpow.pop %v985
        %v987 = vmul.f32 %v956, 1.442695
        %v988 = vpow.pop %v987
        %989 = vadd.xlane.f32.xlu0 %v958
        %v990 = vpop.xlane.xlu0 %989
        %991 = vadd.xlane.f32.xlu0 %v960
        %v992 = vpop.xlane.xlu0 %991
        %993 = vadd.xlane.f32.xlu0 %v962
        %v994 = vpop.xlane.xlu0 %993
        %995 = vadd.xlane.f32.xlu0 %v964
        %v996 = vpop.xlane.xlu0 %995
        %997 = vadd.xlane.f32.xlu0 %v966
        %v998 = vpop.xlane.xlu0 %997
        %999 = vadd.xlane.f32.xlu0 %v968
        %v1000 = vpop.xlane.xlu0 %999
        %1001 = vadd.xlane.f32.xlu0 %v970
        %v1002 = vpop.xlane.xlu0 %1001
        %1003 = vadd.xlane.f32.xlu0 %v972
        %v1004 = vpop.xlane.xlu0 %1003
        %1005 = vadd.xlane.f32.xlu0 %v974
        %v1006 = vpop.xlane.xlu0 %1005
        %1007 = vadd.xlane.f32.xlu0 %v976
        %v1008 = vpop.xlane.xlu0 %1007
        %1009 = vadd.xlane.f32.xlu0 %v978
        %v1010 = vpop.xlane.xlu0 %1009
        %1011 = vadd.xlane.f32.xlu0 %v980
        %v1012 = vpop.xlane.xlu0 %1011
        %1013 = vadd.xlane.f32.xlu0 %v982
        %v1014 = vpop.xlane.xlu0 %1013
        %1015 = vadd.xlane.f32.xlu0 %v984
        %v1016 = vpop.xlane.xlu0 %1015
        %1017 = vadd.xlane.f32.xlu0 %v986
        %v1018 = vpop.xlane.xlu0 %1017
        %1019 = vadd.xlane.f32.xlu0 %v988
        %v1020 = vpop.xlane.xlu0 %1019
        %v1021 = vrcp.pop %v990
        %v1022 = vrcp.pop %v992
        %v1023 = vrcp.pop %v994
        %v1024 = vrcp.pop %v996
        %v1025 = vrcp.pop %v998
        %v1026 = vrcp.pop %v1000
        %v1027 = vrcp.pop %v1002
        %v1028 = vrcp.pop %v1004
        %v1029 = vrcp.pop %v1006
        %v1030 = vrcp.pop %v1008
        %v1031 = vrcp.pop %v1010
        %v1032 = vrcp.pop %v1012
        %v1033 = vrcp.pop %v1014
        %v1034 = vrcp.pop %v1016
        %v1035 = vrcp.pop %v1018
        %v1036 = vrcp.pop %v1020
        %v1037 = vmul.f32 %v958, %v1021
        %v1038 = vmul.f32 %v960, %v1022
        %v1039 = vmul.f32 %v962, %v1023
        %v1040 = vmul.f32 %v964, %v1024
        %v1041 = vmul.f32 %v966, %v1025
        %v1042 = vmul.f32 %v968, %v1026
        %v1043 = vmul.f32 %v970, %v1027
        %v1044 = vmul.f32 %v972, %v1028
        %v1045 = vmul.f32 %v974, %v1029
        %v1046 = vmul.f32 %v976, %v1030
        %v1047 = vmul.f32 %v978, %v1031
        %v1048 = vmul.f32 %v980, %v1032
        %v1049 = vmul.f32 %v982, %v1033
        %v1050 = vmul.f32 %v984, %v1034
        %v1051 = vmul.f32 %v986, %v1035
        %v1052 = vmul.f32 %v988, %v1036
        %1053 = vrot.lane.b32.xlu0 %v345, 64
        %v1054 = vpop.permute.xlu0 %1053
        %1055 = vrot.lane.b32.xlu0 %v350, 64
        %v1056 = vpop.permute.xlu0 %1055
        %1057 = vrot.lane.b32.xlu0 %v355, 64
        %v1058 = vpop.permute.xlu0 %1057
        %1059 = vrot.lane.b32.xlu0 %v360, 64
        %v1060 = vpop.permute.xlu0 %1059
        %1061 = vrot.lane.b32.xlu0 %v365, 64
        %v1062 = vpop.permute.xlu0 %1061
        %1063 = vrot.lane.b32.xlu0 %v370, 64
        %v1064 = vpop.permute.xlu0 %1063
        %1065 = vrot.lane.b32.xlu0 %v375, 64
        %v1066 = vpop.permute.xlu0 %1065
        %1067 = vrot.lane.b32.xlu0 %v380, 64
        %v1068 = vpop.permute.xlu0 %1067
        %1069 = vrot.lane.b32.xlu0 %v385, 64
        %v1070 = vpop.permute.xlu0 %1069
        %1071 = vrot.lane.b32.xlu0 %v390, 64
        %v1072 = vpop.permute.xlu0 %1071
        %1073 = vrot.lane.b32.xlu0 %v395, 64
        %v1074 = vpop.permute.xlu0 %1073
        %1075 = vrot.lane.b32.xlu0 %v400, 64
        %v1076 = vpop.permute.xlu0 %1075
        %1077 = vrot.lane.b32.xlu0 %v405, 64
        %v1078 = vpop.permute.xlu0 %1077
        %1079 = vrot.lane.b32.xlu0 %v410, 64
        %v1080 = vpop.permute.xlu0 %1079
        %1081 = vrot.lane.b32.xlu0 %v415, 64
        %v1082 = vpop.permute.xlu0 %1081
        %1083 = vrot.lane.b32.xlu0 %v420, 64
        %v1084 = vpop.permute.xlu0 %1083
        %1101 = vmatprep.subr.mxu0 0.0
        %1102 = vmatpush1.msra.mxu0 %v1084
        %1103 = vmatprep.subr.mxu0 0.0
        %1104 = vmatpush1.msra.mxu0 %v1082
        %1105 = vmatprep.subr.mxu0 0.0
        %1106 = vmatpush1.msra.mxu0 %v1080
        %1107 = vmatprep.subr.mxu0 0.0
        %1108 = vmatpush1.msra.mxu0 %v1078
        %1109 = vmatprep.subr.mxu0 0.0
        %1110 = vmatpush1.msra.mxu0 %v1076
        %1111 = vmatprep.subr.mxu0 0.0
        %1112 = vmatpush1.msra.mxu0 %v1074
        %1113 = vmatprep.subr.mxu0 0.0
        %1114 = vmatpush1.msra.mxu0 %v1072
        %1115 = vmatprep.subr.mxu0 0.0
        %1116 = vmatpush1.msra.mxu0 %v1070
        %1117 = vmatprep.subr.mxu0 0.0
        %1118 = vmatpush1.msra.mxu0 %v1068
        %1119 = vmatprep.subr.mxu0 0.0
        %1120 = vmatpush1.msra.mxu0 %v1066
        %1121 = vmatprep.subr.mxu0 0.0
        %1122 = vmatpush1.msra.mxu0 %v1064
        %1123 = vmatprep.subr.mxu0 0.0
        %1124 = vmatpush1.msra.mxu0 %v1062
        %1125 = vmatprep.subr.mxu0 0.0
        %1126 = vmatpush1.msra.mxu0 %v1060
        %1127 = vmatprep.subr.mxu0 0.0
        %1128 = vmatpush1.msra.mxu0 %v1058
        %1129 = vmatprep.subr.mxu0 0.0
        %1130 = vmatpush1.msra.mxu0 %v1056
        %1131 = vmatprep.subr.mxu0 0.0
        %1132 = vmatpush1.msra.mxu0 %v1054
        %1133 = vmatprep.subr.mxu0 0.0
        %1134 = vmatpush2.msra.mxu0 0.0
        %1135 = vmatprep.subr.mxu0 0.0
        %1136 = vmatpush2.msra.mxu0 0.0
        %1137 = vmatprep.subr.mxu0 0.0
        %1138 = vmatpush2.msra.mxu0 0.0
        %1139 = vmatprep.subr.mxu0 0.0
        %1140 = vmatpush2.msra.mxu0 0.0
        %1141 = vmatprep.subr.mxu0 0.0
        %1142 = vmatpush2.msra.mxu0 0.0
        %1143 = vmatprep.subr.mxu0 0.0
        %1144 = vmatpush2.msra.mxu0 0.0
        %1145 = vmatprep.subr.mxu0 0.0
        %1146 = vmatpush2.msra.mxu0 0.0
        %1147 = vmatprep.subr.mxu0 0.0
        %1148 = vmatpush2.msra.mxu0 0.0
        %1149 = vmatprep.subr.mxu0 0.0
        %1150 = vmatpush2.msra.mxu0 0.0
        %1151 = vmatprep.subr.mxu0 0.0
        %1152 = vmatpush2.msra.mxu0 0.0
        %1153 = vmatprep.subr.mxu0 0.0
        %1154 = vmatpush2.msra.mxu0 0.0
        %1155 = vmatprep.subr.mxu0 0.0
        %1156 = vmatpush2.msra.mxu0 0.0
        %1157 = vmatprep.subr.mxu0 0.0
        %1158 = vmatpush2.msra.mxu0 0.0
        %1159 = vmatprep.subr.mxu0 0.0
        %1160 = vmatpush2.msra.mxu0 0.0
        %1161 = vmatprep.subr.mxu0 0.0
        %1162 = vmatpush2.msra.mxu0 0.0
        %1163 = vmatprep.subr.mxu0 0.0
        %1164 = vmatpush2.msra.mxu0 0.0
        %1165 = vmatprep.mubr.f32.mxu0 0.0
        %1166 = vmatmul.mubr.f32.gmra.mxu0 %v1037
        %v1167 = vpop.f32.mrf.mxu0
        %v1168 = vadd.f32 0.0, %v1167
        %v1169 = vpop.f32.mrf.mxu0
        %1170 = vmatprep.mubr.f32.mxu0 0.0
        %1171 = vmatmul.mubr.f32.gmra.mxu0 %v1038
        %v1172 = vpop.f32.mrf.mxu0
        %v1173 = vadd.f32 0.0, %v1172
        %v1174 = vpop.f32.mrf.mxu0
        %1175 = vmatprep.mubr.f32.mxu0 0.0
        %1176 = vmatmul.mubr.f32.gmra.mxu0 %v1039
        %v1177 = vpop.f32.mrf.mxu0
        %v1178 = vadd.f32 0.0, %v1177
        %v1179 = vpop.f32.mrf.mxu0
        %1180 = vmatprep.mubr.f32.mxu0 0.0
        %1181 = vmatmul.mubr.f32.gmra.mxu0 %v1040
        %v1182 = vpop.f32.mrf.mxu0
        %v1183 = vadd.f32 0.0, %v1182
        %v1184 = vpop.f32.mrf.mxu0
        %1185 = vmatprep.mubr.f32.mxu0 0.0
        %1186 = vmatmul.mubr.f32.gmra.mxu0 %v1041
        %v1187 = vpop.f32.mrf.mxu0
        %v1188 = vadd.f32 0.0, %v1187
        %v1189 = vpop.f32.mrf.mxu0
        %1190 = vmatprep.mubr.f32.mxu0 0.0
        %1191 = vmatmul.mubr.f32.gmra.mxu0 %v1042
        %v1192 = vpop.f32.mrf.mxu0
        %v1193 = vadd.f32 0.0, %v1192
        %v1194 = vpop.f32.mrf.mxu0
        %1195 = vmatprep.mubr.f32.mxu0 0.0
        %1196 = vmatmul.mubr.f32.gmra.mxu0 %v1043
        %v1197 = vpop.f32.mrf.mxu0
        %v1198 = vadd.f32 0.0, %v1197
        %v1199 = vpop.f32.mrf.mxu0
        %1200 = vmatprep.mubr.f32.mxu0 0.0
        %1201 = vmatmul.mubr.f32.gmra.mxu0 %v1044
        %v1202 = vpop.f32.mrf.mxu0
        %v1203 = vadd.f32 0.0, %v1202
        %v1204 = vpop.f32.mrf.mxu0
        %1205 = vmatprep.mubr.f32.mxu0 0.0
        %1206 = vmatmul.mubr.f32.gmra.mxu0 %v1045
        %v1207 = vpop.f32.mrf.mxu0
        %v1208 = vadd.f32 0.0, %v1207
        %v1209 = vpop.f32.mrf.mxu0
        %1210 = vmatprep.mubr.f32.mxu0 0.0
        %1211 = vmatmul.mubr.f32.gmra.mxu0 %v1046
        %v1212 = vpop.f32.mrf.mxu0
        %v1213 = vadd.f32 0.0, %v1212
        %v1214 = vpop.f32.mrf.mxu0
        %1215 = vmatprep.mubr.f32.mxu0 0.0
        %1216 = vmatmul.mubr.f32.gmra.mxu0 %v1047
        %v1217 = vpop.f32.mrf.mxu0
        %v1218 = vadd.f32 0.0, %v1217
        %v1219 = vpop.f32.mrf.mxu0
        %1220 = vmatprep.mubr.f32.mxu0 0.0
        %1221 = vmatmul.mubr.f32.gmra.mxu0 %v1048
        %v1222 = vpop.f32.mrf.mxu0
        %v1223 = vadd.f32 0.0, %v1222
        %v1224 = vpop.f32.mrf.mxu0
        %1225 = vmatprep.mubr.f32.mxu0 0.0
        %1226 = vmatmul.mubr.f32.gmra.mxu0 %v1049
        %v1227 = vpop.f32.mrf.mxu0
        %v1228 = vadd.f32 0.0, %v1227
        %v1229 = vpop.f32.mrf.mxu0
        %1230 = vmatprep.mubr.f32.mxu0 0.0
        %1231 = vmatmul.mubr.f32.gmra.mxu0 %v1050
        %v1232 = vpop.f32.mrf.mxu0
        %v1233 = vadd.f32 0.0, %v1232
        %v1234 = vpop.f32.mrf.mxu0
        %1235 = vmatprep.mubr.f32.mxu0 0.0
        %1236 = vmatmul.mubr.f32.gmra.mxu0 %v1051
        %v1237 = vpop.f32.mrf.mxu0
        %v1238 = vadd.f32 0.0, %v1237
        %v1239 = vpop.f32.mrf.mxu0
        %1240 = vmatprep.mubr.f32.mxu0 0.0
        %1241 = vmatmul.mubr.f32.gmra.mxu0 %v1052
        %v1242 = vpop.f32.mrf.mxu0
        %v1243 = vadd.f32 0.0, %v1242
        %v1244 = vpop.f32.mrf.mxu0
        %1245 = vdwg.mxu0
        %v1247 = vlaneseq
        %v1248 = vshrl.u32 %v1247, 7
        %v1249 = vsub.s32 0, %v1248
        %v1250 = vrot.slane %v206, %v1249
        %v1253 = vsel %vm471, %v1168, 0
        %v1256 = vsel %vm471, %v1173, 0
        %v1259 = vsel %vm471, %v1178, 0
        %v1262 = vsel %vm471, %v1183, 0
        %v1265 = vsel %vm471, %v1188, 0
        %v1268 = vsel %vm471, %v1193, 0
        %v1271 = vsel %vm471, %v1198, 0
        %v1274 = vsel %vm471, %v1203, 0
        %v1277 = vsel %vm471, %v1208, 0
        %v1280 = vsel %vm471, %v1213, 0
        %v1283 = vsel %vm471, %v1218, 0
        %v1286 = vsel %vm471, %v1223, 0
        %v1289 = vsel %vm471, %v1228, 0
        %v1292 = vsel %vm471, %v1233, 0
        %v1295 = vsel %vm471, %v1238, 0
        %v1298 = vsel %vm471, %v1243, 0
        %1300 = vmatprep.subr.mxu0 0.0
        %1301 = vmatpush1.msra.mxu0 0.0
        %1302 = vmatprep.subr.mxu0 0.0
        %1303 = vmatpush1.msra.mxu0 0.0
        %1304 = vmatprep.subr.mxu0 0.0
        %1305 = vmatpush1.msra.mxu0 0.0
        %1306 = vmatprep.subr.mxu0 0.0
        %1307 = vmatpush1.msra.mxu0 0.0
        %1308 = vmatprep.subr.mxu0 0.0
        %1309 = vmatpush1.msra.mxu0 0.0
        %1310 = vmatprep.subr.mxu0 0.0
        %1311 = vmatpush1.msra.mxu0 0.0
        %1312 = vmatprep.subr.mxu0 0.0
        %1313 = vmatpush1.msra.mxu0 0.0
        %1314 = vmatprep.subr.mxu0 0.0
        %1315 = vmatpush1.msra.mxu0 0.0
        %1316 = vmatprep.subr.mxu0 0.0
        %1317 = vmatpush1.msra.mxu0 0.0
        %1318 = vmatprep.subr.mxu0 0.0
        %1319 = vmatpush1.msra.mxu0 0.0
        %1320 = vmatprep.subr.mxu0 0.0
        %1321 = vmatpush1.msra.mxu0 0.0
        %1322 = vmatprep.subr.mxu0 0.0
        %1323 = vmatpush1.msra.mxu0 0.0
        %1324 = vmatprep.subr.mxu0 0.0
        %1325 = vmatpush1.msra.mxu0 %v205
        %1326 = vmatprep.subr.mxu0 0.0
        %1327 = vmatpush1.msra.mxu0 %v204
        %1328 = vmatprep.subr.mxu0 0.0
        %1329 = vmatpush1.msra.mxu0 %v203
        %1330 = vmatprep.subr.mxu0 0.0
        %1331 = vmatpush1.msra.mxu0 %v202
        %1332 = vmatprep.subr.mxu0 0.0
        %1333 = vmatpush2.msra.mxu0 0.0
        %1334 = vmatprep.subr.mxu0 0.0
        %1335 = vmatpush2.msra.mxu0 0.0
        %1336 = vmatprep.subr.mxu0 0.0
        %1337 = vmatpush2.msra.mxu0 0.0
        %1338 = vmatprep.subr.mxu0 0.0
        %1339 = vmatpush2.msra.mxu0 0.0
        %1340 = vmatprep.subr.mxu0 0.0
        %1341 = vmatpush2.msra.mxu0 0.0
        %1342 = vmatprep.subr.mxu0 0.0
        %1343 = vmatpush2.msra.mxu0 0.0
        %1344 = vmatprep.subr.mxu0 0.0
        %1345 = vmatpush2.msra.mxu0 0.0
        %1346 = vmatprep.subr.mxu0 0.0
        %1347 = vmatpush2.msra.mxu0 0.0
        %1348 = vmatprep.subr.mxu0 0.0
        %1349 = vmatpush2.msra.mxu0 0.0
        %1350 = vmatprep.subr.mxu0 0.0
        %1351 = vmatpush2.msra.mxu0 0.0
        %1352 = vmatprep.subr.mxu0 0.0
        %1353 = vmatpush2.msra.mxu0 0.0
        %1354 = vmatprep.subr.mxu0 0.0
        %1355 = vmatpush2.msra.mxu0 0.0
        %1356 = vmatprep.subr.mxu0 0.0
        %1357 = vmatpush2.msra.mxu0 0.0
        %1358 = vmatprep.subr.mxu0 0.0
        %1359 = vmatpush2.msra.mxu0 0.0
        %1360 = vmatprep.subr.mxu0 0.0
        %1361 = vmatpush2.msra.mxu0 0.0
        %1362 = vmatprep.subr.mxu0 0.0
        %1363 = vmatpush2.msra.mxu0 0.0
        %1364 = vmatprep.mubr.f32.mxu0 0.0
        %1365 = vmatmul.mubr.f32.gmra.mxu0 %v1253
        %v1366 = vpop.f32.mrf.mxu0
        %v1367 = vadd.f32 %v1250, %v1366
        %v1368 = vpop.f32.mrf.mxu0
        %1369 = vmatprep.mubr.f32.mxu0 0.0
        %1370 = vmatmul.mubr.f32.gmra.mxu0 %v1256
        %v1371 = vpop.f32.mrf.mxu0
        %v1372 = vadd.f32 %v1250, %v1371
        %v1373 = vpop.f32.mrf.mxu0
        %1374 = vmatprep.mubr.f32.mxu0 0.0
        %1375 = vmatmul.mubr.f32.gmra.mxu0 %v1259
        %v1376 = vpop.f32.mrf.mxu0
        %v1377 = vadd.f32 %v1250, %v1376
        %v1378 = vpop.f32.mrf.mxu0
        %1379 = vmatprep.mubr.f32.mxu0 0.0
        %1380 = vmatmul.mubr.f32.gmra.mxu0 %v1262
        %v1381 = vpop.f32.mrf.mxu0
        %v1382 = vadd.f32 %v1250, %v1381
        %v1383 = vpop.f32.mrf.mxu0
        %1384 = vmatprep.mubr.f32.mxu0 0.0
        %1385 = vmatmul.mubr.f32.gmra.mxu0 %v1265
        %v1386 = vpop.f32.mrf.mxu0
        %v1387 = vadd.f32 %v1250, %v1386
        %v1388 = vpop.f32.mrf.mxu0
        %1389 = vmatprep.mubr.f32.mxu0 0.0
        %1390 = vmatmul.mubr.f32.gmra.mxu0 %v1268
        %v1391 = vpop.f32.mrf.mxu0
        %v1392 = vadd.f32 %v1250, %v1391
        %v1393 = vpop.f32.mrf.mxu0
        %1394 = vmatprep.mubr.f32.mxu0 0.0
        %1395 = vmatmul.mubr.f32.gmra.mxu0 %v1271
        %v1396 = vpop.f32.mrf.mxu0
        %v1397 = vadd.f32 %v1250, %v1396
        %v1398 = vpop.f32.mrf.mxu0
        %1399 = vmatprep.mubr.f32.mxu0 0.0
        %1400 = vmatmul.mubr.f32.gmra.mxu0 %v1274
        %v1401 = vpop.f32.mrf.mxu0
        %v1402 = vadd.f32 %v1250, %v1401
        %v1403 = vpop.f32.mrf.mxu0
        %1404 = vmatprep.mubr.f32.mxu0 0.0
        %1405 = vmatmul.mubr.f32.gmra.mxu0 %v1277
        %v1406 = vpop.f32.mrf.mxu0
        %v1407 = vadd.f32 %v1250, %v1406
        %v1408 = vpop.f32.mrf.mxu0
        %1409 = vmatprep.mubr.f32.mxu0 0.0
        %1410 = vmatmul.mubr.f32.gmra.mxu0 %v1280
        %v1411 = vpop.f32.mrf.mxu0
        %v1412 = vadd.f32 %v1250, %v1411
        %v1413 = vpop.f32.mrf.mxu0
        %1414 = vmatprep.mubr.f32.mxu0 0.0
        %1415 = vmatmul.mubr.f32.gmra.mxu0 %v1283
        %v1416 = vpop.f32.mrf.mxu0
        %v1417 = vadd.f32 %v1250, %v1416
        %v1418 = vpop.f32.mrf.mxu0
        %1419 = vmatprep.mubr.f32.mxu0 0.0
        %1420 = vmatmul.mubr.f32.gmra.mxu0 %v1286
        %v1421 = vpop.f32.mrf.mxu0
        %v1422 = vadd.f32 %v1250, %v1421
        %v1423 = vpop.f32.mrf.mxu0
        %1424 = vmatprep.mubr.f32.mxu0 0.0
        %1425 = vmatmul.mubr.f32.gmra.mxu0 %v1289
        %v1426 = vpop.f32.mrf.mxu0
        %v1427 = vadd.f32 %v1250, %v1426
        %v1428 = vpop.f32.mrf.mxu0
        %1429 = vmatprep.mubr.f32.mxu0 0.0
        %1430 = vmatmul.mubr.f32.gmra.mxu0 %v1292
        %v1431 = vpop.f32.mrf.mxu0
        %v1432 = vadd.f32 %v1250, %v1431
        %v1433 = vpop.f32.mrf.mxu0
        %1434 = vmatprep.mubr.f32.mxu0 0.0
        %1435 = vmatmul.mubr.f32.gmra.mxu0 %v1295
        %v1436 = vpop.f32.mrf.mxu0
        %v1437 = vadd.f32 %v1250, %v1436
        %v1438 = vpop.f32.mrf.mxu0
        %1439 = vmatprep.mubr.f32.mxu0 0.0
        %1440 = vmatmul.mubr.f32.gmra.mxu0 %v1298
        %v1441 = vpop.f32.mrf.mxu0
        %v1442 = vadd.f32 %v1250, %v1441
        %v1443 = vpop.f32.mrf.mxu0
        %1444 = vdwg.mxu0
        %1445 = vset.pattern.permute.xlu0 17
        %1446 = vperm.xlu0 %1445, %v209
        %v1447 = vpop.permute.xlu0 %1446
        %1449 = vset.pattern.permute.xlu0 17
        %1450 = vperm.xlu0 %1449, %v210
        %v1451 = vpop.permute.xlu0 %1450
        %1453 = vset.pattern.permute.xlu0 17
        %1454 = vperm.xlu0 %1453, %v211
        %v1455 = vpop.permute.xlu0 %1454
        %1457 = vset.pattern.permute.xlu0 17
        %1458 = vperm.xlu0 %1457, %v212
        %v1459 = vpop.permute.xlu0 %1458
        %1461 = vset.pattern.permute.xlu0 17
        %1462 = vperm.xlu0 %1461, %v213
        %v1463 = vpop.permute.xlu0 %1462
        %1465 = vset.pattern.permute.xlu0 17
        %1466 = vperm.xlu0 %1465, %v214
        %v1467 = vpop.permute.xlu0 %1466
        %1469 = vset.pattern.permute.xlu0 17
        %1470 = vperm.xlu0 %1469, %v215
        %v1471 = vpop.permute.xlu0 %1470
        %1473 = vset.pattern.permute.xlu0 17
        %1474 = vperm.xlu0 %1473, %v216
        %v1475 = vpop.permute.xlu0 %1474
        %1477 = vset.pattern.permute.xlu0 17
        %1478 = vperm.xlu0 %1477, %v217
        %v1479 = vpop.permute.xlu0 %1478
        %1481 = vset.pattern.permute.xlu0 17
        %1482 = vperm.xlu0 %1481, %v218
        %v1483 = vpop.permute.xlu0 %1482
        %1485 = vset.pattern.permute.xlu0 17
        %1486 = vperm.xlu0 %1485, %v219
        %v1487 = vpop.permute.xlu0 %1486
        %1489 = vset.pattern.permute.xlu0 17
        %1490 = vperm.xlu0 %1489, %v220
        %v1491 = vpop.permute.xlu0 %1490
        %1493 = vset.pattern.permute.xlu0 17
        %1494 = vperm.xlu0 %1493, %v221
        %v1495 = vpop.permute.xlu0 %1494
        %1497 = vset.pattern.permute.xlu0 17
        %1498 = vperm.xlu0 %1497, %v222
        %v1499 = vpop.permute.xlu0 %1498
        %1501 = vset.pattern.permute.xlu0 17
        %1502 = vperm.xlu0 %1501, %v223
        %v1503 = vpop.permute.xlu0 %1502
        %1505 = vset.pattern.permute.xlu0 17
        %1506 = vperm.xlu0 %1505, %v224
        %v1507 = vpop.permute.xlu0 %1506
        %v1509 = vmul.f32 %v1367, %v1447
        %v1510 = vmul.f32 %v1372, %v1451
        %v1511 = vmul.f32 %v1377, %v1455
        %v1512 = vmul.f32 %v1382, %v1459
        %v1513 = vmul.f32 %v1387, %v1463
        %v1514 = vmul.f32 %v1392, %v1467
        %v1515 = vmul.f32 %v1397, %v1471
        %v1516 = vmul.f32 %v1402, %v1475
        %v1517 = vmul.f32 %v1407, %v1479
        %v1518 = vmul.f32 %v1412, %v1483
        %v1519 = vmul.f32 %v1417, %v1487
        %v1520 = vmul.f32 %v1422, %v1491
        %v1521 = vmul.f32 %v1427, %v1495
        %v1522 = vmul.f32 %v1432, %v1499
        %v1523 = vmul.f32 %v1437, %v1503
        %v1524 = vmul.f32 %v1442, %v1507
        %vm1525 = vcmask 146568
        %v1526 = vsel %vm1525, %v209, 0.0
        %v1527 = vrot.slane %v1526, 4
        %v1528 = vadd.f32 %v1526, %v1527
        %v1529 = vrot.slane %v1528, 2
        %v1530 = vadd.f32 %v1528, %v1529
        %v1531 = vrot.slane %v1530, 1
        %v1532 = vadd.f32 %v1530, %v1531
        %v1533 = vsel %vm1525, %v210, 0.0
        %v1534 = vrot.slane %v1533, 4
        %v1535 = vadd.f32 %v1533, %v1534
        %v1536 = vrot.slane %v1535, 2
        %v1537 = vadd.f32 %v1535, %v1536
        %v1538 = vrot.slane %v1537, 1
        %v1539 = vadd.f32 %v1537, %v1538
        %v1540 = vsel %vm1525, %v211, 0.0
        %v1541 = vrot.slane %v1540, 4
        %v1542 = vadd.f32 %v1540, %v1541
        %v1543 = vrot.slane %v1542, 2
        %v1544 = vadd.f32 %v1542, %v1543
        %v1545 = vrot.slane %v1544, 1
        %v1546 = vadd.f32 %v1544, %v1545
        %v1547 = vsel %vm1525, %v212, 0.0
        %v1548 = vrot.slane %v1547, 4
        %v1549 = vadd.f32 %v1547, %v1548
        %v1550 = vrot.slane %v1549, 2
        %v1551 = vadd.f32 %v1549, %v1550
        %v1552 = vrot.slane %v1551, 1
        %v1553 = vadd.f32 %v1551, %v1552
        %v1554 = vsel %vm1525, %v213, 0.0
        %v1555 = vrot.slane %v1554, 4
        %v1556 = vadd.f32 %v1554, %v1555
        %v1557 = vrot.slane %v1556, 2
        %v1558 = vadd.f32 %v1556, %v1557
        %v1559 = vrot.slane %v1558, 1
        %v1560 = vadd.f32 %v1558, %v1559
        %v1561 = vsel %vm1525, %v214, 0.0
        %v1562 = vrot.slane %v1561, 4
        %v1563 = vadd.f32 %v1561, %v1562
        %v1564 = vrot.slane %v1563, 2
        %v1565 = vadd.f32 %v1563, %v1564
        %v1566 = vrot.slane %v1565, 1
        %v1567 = vadd.f32 %v1565, %v1566
        %v1568 = vsel %vm1525, %v215, 0.0
        %v1569 = vrot.slane %v1568, 4
        %v1570 = vadd.f32 %v1568, %v1569
        %v1571 = vrot.slane %v1570, 2
        %v1572 = vadd.f32 %v1570, %v1571
        %v1573 = vrot.slane %v1572, 1
        %v1574 = vadd.f32 %v1572, %v1573
        %v1575 = vsel %vm1525, %v216, 0.0
        %v1576 = vrot.slane %v1575, 4
        %v1577 = vadd.f32 %v1575, %v1576
        %v1578 = vrot.slane %v1577, 2
        %v1579 = vadd.f32 %v1577, %v1578
        %v1580 = vrot.slane %v1579, 1
        %v1581 = vadd.f32 %v1579, %v1580
        %v1582 = vsel %vm1525, %v217, 0.0
        %v1583 = vrot.slane %v1582, 4
        %v1584 = vadd.f32 %v1582, %v1583
        %v1585 = vrot.slane %v1584, 2
        %v1586 = vadd.f32 %v1584, %v1585
        %v1587 = vrot.slane %v1586, 1
        %v1588 = vadd.f32 %v1586, %v1587
        %v1589 = vsel %vm1525, %v218, 0.0
        %v1590 = vrot.slane %v1589, 4
        %v1591 = vadd.f32 %v1589, %v1590
        %v1592 = vrot.slane %v1591, 2
        %v1593 = vadd.f32 %v1591, %v1592
        %v1594 = vrot.slane %v1593, 1
        %v1595 = vadd.f32 %v1593, %v1594
        %v1596 = vsel %vm1525, %v219, 0.0
        %v1597 = vrot.slane %v1596, 4
        %v1598 = vadd.f32 %v1596, %v1597
        %v1599 = vrot.slane %v1598, 2
        %v1600 = vadd.f32 %v1598, %v1599
        %v1601 = vrot.slane %v1600, 1
        %v1602 = vadd.f32 %v1600, %v1601
        %v1603 = vsel %vm1525, %v220, 0.0
        %v1604 = vrot.slane %v1603, 4
        %v1605 = vadd.f32 %v1603, %v1604
        %v1606 = vrot.slane %v1605, 2
        %v1607 = vadd.f32 %v1605, %v1606
        %v1608 = vrot.slane %v1607, 1
        %v1609 = vadd.f32 %v1607, %v1608
        %v1610 = vsel %vm1525, %v221, 0.0
        %v1611 = vrot.slane %v1610, 4
        %v1612 = vadd.f32 %v1610, %v1611
        %v1613 = vrot.slane %v1612, 2
        %v1614 = vadd.f32 %v1612, %v1613
        %v1615 = vrot.slane %v1614, 1
        %v1616 = vadd.f32 %v1614, %v1615
        %v1617 = vsel %vm1525, %v222, 0.0
        %v1618 = vrot.slane %v1617, 4
        %v1619 = vadd.f32 %v1617, %v1618
        %v1620 = vrot.slane %v1619, 2
        %v1621 = vadd.f32 %v1619, %v1620
        %v1622 = vrot.slane %v1621, 1
        %v1623 = vadd.f32 %v1621, %v1622
        %v1624 = vsel %vm1525, %v223, 0.0
        %v1625 = vrot.slane %v1624, 4
        %v1626 = vadd.f32 %v1624, %v1625
        %v1627 = vrot.slane %v1626, 2
        %v1628 = vadd.f32 %v1626, %v1627
        %v1629 = vrot.slane %v1628, 1
        %v1630 = vadd.f32 %v1628, %v1629
        %v1631 = vsel %vm1525, %v224, 0.0
        %v1632 = vrot.slane %v1631, 4
        %v1633 = vadd.f32 %v1631, %v1632
        %v1634 = vrot.slane %v1633, 2
        %v1635 = vadd.f32 %v1633, %v1634
        %v1636 = vrot.slane %v1635, 1
        %v1637 = vadd.f32 %v1635, %v1636
        %v1638 = vmax.f32 %v1532, 1.0
        %v1639 = vmax.f32 %v1539, 1.0
        %v1640 = vmax.f32 %v1546, 1.0
        %v1641 = vmax.f32 %v1553, 1.0
        %v1642 = vmax.f32 %v1560, 1.0
        %v1643 = vmax.f32 %v1567, 1.0
        %v1644 = vmax.f32 %v1574, 1.0
        %v1645 = vmax.f32 %v1581, 1.0
        %v1646 = vmax.f32 %v1588, 1.0
        %v1647 = vmax.f32 %v1595, 1.0
        %v1648 = vmax.f32 %v1602, 1.0
        %v1649 = vmax.f32 %v1609, 1.0
        %v1650 = vmax.f32 %v1616, 1.0
        %v1651 = vmax.f32 %v1623, 1.0
        %v1652 = vmax.f32 %v1630, 1.0
        %v1653 = vmax.f32 %v1637, 1.0
        %v1654 = vsel %vm471, %v1509, 0.0
        %v1655 = vrot.slane %v1654, 4
        %v1656 = vadd.f32 %v1654, %v1655
        %v1657 = vrot.slane %v1656, 2
        %v1658 = vadd.f32 %v1656, %v1657
        %v1659 = vrot.slane %v1658, 1
        %v1660 = vadd.f32 %v1658, %v1659
        %v1661 = vsel %vm471, %v1510, 0.0
        %v1662 = vrot.slane %v1661, 4
        %v1663 = vadd.f32 %v1661, %v1662
        %v1664 = vrot.slane %v1663, 2
        %v1665 = vadd.f32 %v1663, %v1664
        %v1666 = vrot.slane %v1665, 1
        %v1667 = vadd.f32 %v1665, %v1666
        %v1668 = vsel %vm471, %v1511, 0.0
        %v1669 = vrot.slane %v1668, 4
        %v1670 = vadd.f32 %v1668, %v1669
        %v1671 = vrot.slane %v1670, 2
        %v1672 = vadd.f32 %v1670, %v1671
        %v1673 = vrot.slane %v1672, 1
        %v1674 = vadd.f32 %v1672, %v1673
        %v1675 = vsel %vm471, %v1512, 0.0
        %v1676 = vrot.slane %v1675, 4
        %v1677 = vadd.f32 %v1675, %v1676
        %v1678 = vrot.slane %v1677, 2
        %v1679 = vadd.f32 %v1677, %v1678
        %v1680 = vrot.slane %v1679, 1
        %v1681 = vadd.f32 %v1679, %v1680
        %v1682 = vsel %vm471, %v1513, 0.0
        %v1683 = vrot.slane %v1682, 4
        %v1684 = vadd.f32 %v1682, %v1683
        %v1685 = vrot.slane %v1684, 2
        %v1686 = vadd.f32 %v1684, %v1685
        %v1687 = vrot.slane %v1686, 1
        %v1688 = vadd.f32 %v1686, %v1687
        %v1689 = vsel %vm471, %v1514, 0.0
        %v1690 = vrot.slane %v1689, 4
        %v1691 = vadd.f32 %v1689, %v1690
        %v1692 = vrot.slane %v1691, 2
        %v1693 = vadd.f32 %v1691, %v1692
        %v1694 = vrot.slane %v1693, 1
        %v1695 = vadd.f32 %v1693, %v1694
        %v1696 = vsel %vm471, %v1515, 0.0
        %v1697 = vrot.slane %v1696, 4
        %v1698 = vadd.f32 %v1696, %v1697
        %v1699 = vrot.slane %v1698, 2
        %v1700 = vadd.f32 %v1698, %v1699
        %v1701 = vrot.slane %v1700, 1
        %v1702 = vadd.f32 %v1700, %v1701
        %v1703 = vsel %vm471, %v1516, 0.0
        %v1704 = vrot.slane %v1703, 4
        %v1705 = vadd.f32 %v1703, %v1704
        %v1706 = vrot.slane %v1705, 2
        %v1707 = vadd.f32 %v1705, %v1706
        %v1708 = vrot.slane %v1707, 1
        %v1709 = vadd.f32 %v1707, %v1708
        %v1710 = vsel %vm471, %v1517, 0.0
        %v1711 = vrot.slane %v1710, 4
        %v1712 = vadd.f32 %v1710, %v1711
        %v1713 = vrot.slane %v1712, 2
        %v1714 = vadd.f32 %v1712, %v1713
        %v1715 = vrot.slane %v1714, 1
        %v1716 = vadd.f32 %v1714, %v1715
        %v1717 = vsel %vm471, %v1518, 0.0
        %v1718 = vrot.slane %v1717, 4
        %v1719 = vadd.f32 %v1717, %v1718
        %v1720 = vrot.slane %v1719, 2
        %v1721 = vadd.f32 %v1719, %v1720
        %v1722 = vrot.slane %v1721, 1
        %v1723 = vadd.f32 %v1721, %v1722
        %v1724 = vsel %vm471, %v1519, 0.0
        %v1725 = vrot.slane %v1724, 4
        %v1726 = vadd.f32 %v1724, %v1725
        %v1727 = vrot.slane %v1726, 2
        %v1728 = vadd.f32 %v1726, %v1727
        %v1729 = vrot.slane %v1728, 1
        %v1730 = vadd.f32 %v1728, %v1729
        %v1731 = vsel %vm471, %v1520, 0.0
        %v1732 = vrot.slane %v1731, 4
        %v1733 = vadd.f32 %v1731, %v1732
        %v1734 = vrot.slane %v1733, 2
        %v1735 = vadd.f32 %v1733, %v1734
        %v1736 = vrot.slane %v1735, 1
        %v1737 = vadd.f32 %v1735, %v1736
        %v1738 = vsel %vm471, %v1521, 0.0
        %v1739 = vrot.slane %v1738, 4
        %v1740 = vadd.f32 %v1738, %v1739
        %v1741 = vrot.slane %v1740, 2
        %v1742 = vadd.f32 %v1740, %v1741
        %v1743 = vrot.slane %v1742, 1
        %v1744 = vadd.f32 %v1742, %v1743
        %v1745 = vsel %vm471, %v1522, 0.0
        %v1746 = vrot.slane %v1745, 4
        %v1747 = vadd.f32 %v1745, %v1746
        %v1748 = vrot.slane %v1747, 2
        %v1749 = vadd.f32 %v1747, %v1748
        %v1750 = vrot.slane %v1749, 1
        %v1751 = vadd.f32 %v1749, %v1750
        %v1752 = vsel %vm471, %v1523, 0.0
        %v1753 = vrot.slane %v1752, 4
        %v1754 = vadd.f32 %v1752, %v1753
        %v1755 = vrot.slane %v1754, 2
        %v1756 = vadd.f32 %v1754, %v1755
        %v1757 = vrot.slane %v1756, 1
        %v1758 = vadd.f32 %v1756, %v1757
        %v1759 = vsel %vm471, %v1524, 0.0
        %v1760 = vrot.slane %v1759, 4
        %v1761 = vadd.f32 %v1759, %v1760
        %v1762 = vrot.slane %v1761, 2
        %v1763 = vadd.f32 %v1761, %v1762
        %v1764 = vrot.slane %v1763, 1
        %v1765 = vadd.f32 %v1763, %v1764
        %v1766 = vrcp.pop %v1638
        %v1767 = vrcp.pop %v1639
        %v1768 = vrcp.pop %v1640
        %v1769 = vrcp.pop %v1641
        %v1770 = vrcp.pop %v1642
        %v1771 = vrcp.pop %v1643
        %v1772 = vrcp.pop %v1644
        %v1773 = vrcp.pop %v1645
        %v1774 = vrcp.pop %v1646
        %v1775 = vrcp.pop %v1647
        %v1776 = vrcp.pop %v1648
        %v1777 = vrcp.pop %v1649
        %v1778 = vrcp.pop %v1650
        %v1779 = vrcp.pop %v1651
        %v1780 = vrcp.pop %v1652
        %v1781 = vrcp.pop %v1653
        %1783 = vset.pattern.permute.xlu0 17
        %1784 = vperm.xlu0 %1783, %v1766
        %v1785 = vpop.permute.xlu0 %1784
        %1788 = vset.pattern.permute.xlu0 17
        %1789 = vperm.xlu0 %1788, %v1767
        %v1790 = vpop.permute.xlu0 %1789
        %1793 = vset.pattern.permute.xlu0 17
        %1794 = vperm.xlu0 %1793, %v1768
        %v1795 = vpop.permute.xlu0 %1794
        %1798 = vset.pattern.permute.xlu0 17
        %1799 = vperm.xlu0 %1798, %v1769
        %v1800 = vpop.permute.xlu0 %1799
        %1803 = vset.pattern.permute.xlu0 17
        %1804 = vperm.xlu0 %1803, %v1770
        %v1805 = vpop.permute.xlu0 %1804
        %1808 = vset.pattern.permute.xlu0 17
        %1809 = vperm.xlu0 %1808, %v1771
        %v1810 = vpop.permute.xlu0 %1809
        %1813 = vset.pattern.permute.xlu0 17
        %1814 = vperm.xlu0 %1813, %v1772
        %v1815 = vpop.permute.xlu0 %1814
        %1818 = vset.pattern.permute.xlu0 17
        %1819 = vperm.xlu0 %1818, %v1773
        %v1820 = vpop.permute.xlu0 %1819
        %1823 = vset.pattern.permute.xlu0 17
        %1824 = vperm.xlu0 %1823, %v1774
        %v1825 = vpop.permute.xlu0 %1824
        %1828 = vset.pattern.permute.xlu0 17
        %1829 = vperm.xlu0 %1828, %v1775
        %v1830 = vpop.permute.xlu0 %1829
        %1833 = vset.pattern.permute.xlu0 17
        %1834 = vperm.xlu0 %1833, %v1776
        %v1835 = vpop.permute.xlu0 %1834
        %1838 = vset.pattern.permute.xlu0 17
        %1839 = vperm.xlu0 %1838, %v1777
        %v1840 = vpop.permute.xlu0 %1839
        %1843 = vset.pattern.permute.xlu0 17
        %1844 = vperm.xlu0 %1843, %v1778
        %v1845 = vpop.permute.xlu0 %1844
        %1848 = vset.pattern.permute.xlu0 17
        %1849 = vperm.xlu0 %1848, %v1779
        %v1850 = vpop.permute.xlu0 %1849
        %1853 = vset.pattern.permute.xlu0 17
        %1854 = vperm.xlu0 %1853, %v1780
        %v1855 = vpop.permute.xlu0 %1854
        %1858 = vset.pattern.permute.xlu0 17
        %1859 = vperm.xlu0 %1858, %v1781
        %v1860 = vpop.permute.xlu0 %1859
        %v1862 = vmul.f32 %v1660, %v1785
        %v1863 = vmul.f32 %v1667, %v1790
        %v1864 = vmul.f32 %v1674, %v1795
        %v1865 = vmul.f32 %v1681, %v1800
        %v1866 = vmul.f32 %v1688, %v1805
        %v1867 = vmul.f32 %v1695, %v1810
        %v1868 = vmul.f32 %v1702, %v1815
        %v1869 = vmul.f32 %v1709, %v1820
        %v1870 = vmul.f32 %v1716, %v1825
        %v1871 = vmul.f32 %v1723, %v1830
        %v1872 = vmul.f32 %v1730, %v1835
        %v1873 = vmul.f32 %v1737, %v1840
        %v1874 = vmul.f32 %v1744, %v1845
        %v1875 = vmul.f32 %v1751, %v1850
        %v1876 = vmul.f32 %v1758, %v1855
        %v1877 = vmul.f32 %v1765, %v1860
        %vm1878 = vcmp.gt.f32.partialorder %v209, 0.0
        %vm1879 = vcmp.gt.f32.partialorder %v210, 0.0
        %vm1880 = vcmp.gt.f32.partialorder %v211, 0.0
        %vm1881 = vcmp.gt.f32.partialorder %v212, 0.0
        %vm1882 = vcmp.gt.f32.partialorder %v213, 0.0
        %vm1883 = vcmp.gt.f32.partialorder %v214, 0.0
        %vm1884 = vcmp.gt.f32.partialorder %v215, 0.0
        %vm1885 = vcmp.gt.f32.partialorder %v216, 0.0
        %vm1886 = vcmp.gt.f32.partialorder %v217, 0.0
        %vm1887 = vcmp.gt.f32.partialorder %v218, 0.0
        %vm1888 = vcmp.gt.f32.partialorder %v219, 0.0
        %vm1889 = vcmp.gt.f32.partialorder %v220, 0.0
        %vm1890 = vcmp.gt.f32.partialorder %v221, 0.0
        %vm1891 = vcmp.gt.f32.partialorder %v222, 0.0
        %vm1892 = vcmp.gt.f32.partialorder %v223, 0.0
        %vm1893 = vcmp.gt.f32.partialorder %v224, 0.0
        %v1894 = vsel %vm1878, 1, 0
        %v1895 = vsel %vm1879, 1, 0
        %v1896 = vsel %vm1880, 1, 0
        %v1897 = vsel %vm1881, 1, 0
        %v1898 = vsel %vm1882, 1, 0
        %v1899 = vsel %vm1883, 1, 0
        %v1900 = vsel %vm1884, 1, 0
        %v1901 = vsel %vm1885, 1, 0
        %v1902 = vsel %vm1886, 1, 0
        %v1903 = vsel %vm1887, 1, 0
        %v1904 = vsel %vm1888, 1, 0
        %v1905 = vsel %vm1889, 1, 0
        %v1906 = vsel %vm1890, 1, 0
        %v1907 = vsel %vm1891, 1, 0
        %v1908 = vsel %vm1892, 1, 0
        %v1909 = vsel %vm1893, 1, 0
        %1910 = vset.pattern.permute.xlu0 17
        %1911 = vperm.xlu0 %1910, %v1894
        %v1912 = vpop.permute.xlu0 %1911
        %1913 = vset.pattern.permute.xlu0 17
        %1914 = vperm.xlu0 %1913, %v1895
        %v1915 = vpop.permute.xlu0 %1914
        %1916 = vset.pattern.permute.xlu0 17
        %1917 = vperm.xlu0 %1916, %v1896
        %v1918 = vpop.permute.xlu0 %1917
        %1919 = vset.pattern.permute.xlu0 17
        %1920 = vperm.xlu0 %1919, %v1897
        %v1921 = vpop.permute.xlu0 %1920
        %1922 = vset.pattern.permute.xlu0 17
        %1923 = vperm.xlu0 %1922, %v1898
        %v1924 = vpop.permute.xlu0 %1923
        %1925 = vset.pattern.permute.xlu0 17
        %1926 = vperm.xlu0 %1925, %v1899
        %v1927 = vpop.permute.xlu0 %1926
        %1928 = vset.pattern.permute.xlu0 17
        %1929 = vperm.xlu0 %1928, %v1900
        %v1930 = vpop.permute.xlu0 %1929
        %1931 = vset.pattern.permute.xlu0 17
        %1932 = vperm.xlu0 %1931, %v1901
        %v1933 = vpop.permute.xlu0 %1932
        %1934 = vset.pattern.permute.xlu0 17
        %1935 = vperm.xlu0 %1934, %v1902
        %v1936 = vpop.permute.xlu0 %1935
        %1937 = vset.pattern.permute.xlu0 17
        %1938 = vperm.xlu0 %1937, %v1903
        %v1939 = vpop.permute.xlu0 %1938
        %1940 = vset.pattern.permute.xlu0 17
        %1941 = vperm.xlu0 %1940, %v1904
        %v1942 = vpop.permute.xlu0 %1941
        %1943 = vset.pattern.permute.xlu0 17
        %1944 = vperm.xlu0 %1943, %v1905
        %v1945 = vpop.permute.xlu0 %1944
        %1946 = vset.pattern.permute.xlu0 17
        %1947 = vperm.xlu0 %1946, %v1906
        %v1948 = vpop.permute.xlu0 %1947
        %1949 = vset.pattern.permute.xlu0 17
        %1950 = vperm.xlu0 %1949, %v1907
        %v1951 = vpop.permute.xlu0 %1950
        %1952 = vset.pattern.permute.xlu0 17
        %1953 = vperm.xlu0 %1952, %v1908
        %v1954 = vpop.permute.xlu0 %1953
        %1955 = vset.pattern.permute.xlu0 17
        %1956 = vperm.xlu0 %1955, %v1909
        %v1957 = vpop.permute.xlu0 %1956
        %vm1958 = vcmp.eq.s32.totalorder %v1912, 1
        %vm1959 = vcmp.eq.s32.totalorder %v1915, 1
        %vm1960 = vcmp.eq.s32.totalorder %v1918, 1
        %vm1961 = vcmp.eq.s32.totalorder %v1921, 1
        %vm1962 = vcmp.eq.s32.totalorder %v1924, 1
        %vm1963 = vcmp.eq.s32.totalorder %v1927, 1
        %vm1964 = vcmp.eq.s32.totalorder %v1930, 1
        %vm1965 = vcmp.eq.s32.totalorder %v1933, 1
        %vm1966 = vcmp.eq.s32.totalorder %v1936, 1
        %vm1967 = vcmp.eq.s32.totalorder %v1939, 1
        %vm1968 = vcmp.eq.s32.totalorder %v1942, 1
        %vm1969 = vcmp.eq.s32.totalorder %v1945, 1
        %vm1970 = vcmp.eq.s32.totalorder %v1948, 1
        %vm1971 = vcmp.eq.s32.totalorder %v1951, 1
        %vm1972 = vcmp.eq.s32.totalorder %v1954, 1
        %vm1973 = vcmp.eq.s32.totalorder %v1957, 1
        %v1974 = vsel %vm1958, %v1509, -1e+30
        %v1975 = vsel %vm1959, %v1510, -1e+30
        %v1976 = vsel %vm1960, %v1511, -1e+30
        %v1977 = vsel %vm1961, %v1512, -1e+30
        %v1978 = vsel %vm1962, %v1513, -1e+30
        %v1979 = vsel %vm1963, %v1514, -1e+30
        %v1980 = vsel %vm1964, %v1515, -1e+30
        %v1981 = vsel %vm1965, %v1516, -1e+30
        %v1982 = vsel %vm1966, %v1517, -1e+30
        %v1983 = vsel %vm1967, %v1518, -1e+30
        %v1984 = vsel %vm1968, %v1519, -1e+30
        %v1985 = vsel %vm1969, %v1520, -1e+30
        %v1986 = vsel %vm1970, %v1521, -1e+30
        %v1987 = vsel %vm1971, %v1522, -1e+30
        %v1988 = vsel %vm1972, %v1523, -1e+30
        %v1989 = vsel %vm1973, %v1524, -1e+30
        %v1990 = vsel %vm471, %v1974, -inf
        %v1991 = vrot.slane %v1990, 4
        %v1992 = vmax.f32 %v1990, %v1991
        %v1993 = vrot.slane %v1992, 2
        %v1994 = vmax.f32 %v1992, %v1993
        %v1995 = vrot.slane %v1994, 1
        %v1996 = vmax.f32 %v1994, %v1995
        %v1997 = vsel %vm471, %v1975, -inf
        %v1998 = vrot.slane %v1997, 4
        %v1999 = vmax.f32 %v1997, %v1998
        %v2000 = vrot.slane %v1999, 2
        %v2001 = vmax.f32 %v1999, %v2000
        %v2002 = vrot.slane %v2001, 1
        %v2003 = vmax.f32 %v2001, %v2002
        %v2004 = vsel %vm471, %v1976, -inf
        %v2005 = vrot.slane %v2004, 4
        %v2006 = vmax.f32 %v2004, %v2005
        %v2007 = vrot.slane %v2006, 2
        %v2008 = vmax.f32 %v2006, %v2007
        %v2009 = vrot.slane %v2008, 1
        %v2010 = vmax.f32 %v2008, %v2009
        %v2011 = vsel %vm471, %v1977, -inf
        %v2012 = vrot.slane %v2011, 4
        %v2013 = vmax.f32 %v2011, %v2012
        %v2014 = vrot.slane %v2013, 2
        %v2015 = vmax.f32 %v2013, %v2014
        %v2016 = vrot.slane %v2015, 1
        %v2017 = vmax.f32 %v2015, %v2016
        %v2018 = vsel %vm471, %v1978, -inf
        %v2019 = vrot.slane %v2018, 4
        %v2020 = vmax.f32 %v2018, %v2019
        %v2021 = vrot.slane %v2020, 2
        %v2022 = vmax.f32 %v2020, %v2021
        %v2023 = vrot.slane %v2022, 1
        %v2024 = vmax.f32 %v2022, %v2023
        %v2025 = vsel %vm471, %v1979, -inf
        %v2026 = vrot.slane %v2025, 4
        %v2027 = vmax.f32 %v2025, %v2026
        %v2028 = vrot.slane %v2027, 2
        %v2029 = vmax.f32 %v2027, %v2028
        %v2030 = vrot.slane %v2029, 1
        %v2031 = vmax.f32 %v2029, %v2030
        %v2032 = vsel %vm471, %v1980, -inf
        %v2033 = vrot.slane %v2032, 4
        %v2034 = vmax.f32 %v2032, %v2033
        %v2035 = vrot.slane %v2034, 2
        %v2036 = vmax.f32 %v2034, %v2035
        %v2037 = vrot.slane %v2036, 1
        %v2038 = vmax.f32 %v2036, %v2037
        %v2039 = vsel %vm471, %v1981, -inf
        %v2040 = vrot.slane %v2039, 4
        %v2041 = vmax.f32 %v2039, %v2040
        %v2042 = vrot.slane %v2041, 2
        %v2043 = vmax.f32 %v2041, %v2042
        %v2044 = vrot.slane %v2043, 1
        %v2045 = vmax.f32 %v2043, %v2044
        %v2046 = vsel %vm471, %v1982, -inf
        %v2047 = vrot.slane %v2046, 4
        %v2048 = vmax.f32 %v2046, %v2047
        %v2049 = vrot.slane %v2048, 2
        %v2050 = vmax.f32 %v2048, %v2049
        %v2051 = vrot.slane %v2050, 1
        %v2052 = vmax.f32 %v2050, %v2051
        %v2053 = vsel %vm471, %v1983, -inf
        %v2054 = vrot.slane %v2053, 4
        %v2055 = vmax.f32 %v2053, %v2054
        %v2056 = vrot.slane %v2055, 2
        %v2057 = vmax.f32 %v2055, %v2056
        %v2058 = vrot.slane %v2057, 1
        %v2059 = vmax.f32 %v2057, %v2058
        %v2060 = vsel %vm471, %v1984, -inf
        %v2061 = vrot.slane %v2060, 4
        %v2062 = vmax.f32 %v2060, %v2061
        %v2063 = vrot.slane %v2062, 2
        %v2064 = vmax.f32 %v2062, %v2063
        %v2065 = vrot.slane %v2064, 1
        %v2066 = vmax.f32 %v2064, %v2065
        %v2067 = vsel %vm471, %v1985, -inf
        %v2068 = vrot.slane %v2067, 4
        %v2069 = vmax.f32 %v2067, %v2068
        %v2070 = vrot.slane %v2069, 2
        %v2071 = vmax.f32 %v2069, %v2070
        %v2072 = vrot.slane %v2071, 1
        %v2073 = vmax.f32 %v2071, %v2072
        %v2074 = vsel %vm471, %v1986, -inf
        %v2075 = vrot.slane %v2074, 4
        %v2076 = vmax.f32 %v2074, %v2075
        %v2077 = vrot.slane %v2076, 2
        %v2078 = vmax.f32 %v2076, %v2077
        %v2079 = vrot.slane %v2078, 1
        %v2080 = vmax.f32 %v2078, %v2079
        %v2081 = vsel %vm471, %v1987, -inf
        %v2082 = vrot.slane %v2081, 4
        %v2083 = vmax.f32 %v2081, %v2082
        %v2084 = vrot.slane %v2083, 2
        %v2085 = vmax.f32 %v2083, %v2084
        %v2086 = vrot.slane %v2085, 1
        %v2087 = vmax.f32 %v2085, %v2086
        %v2088 = vsel %vm471, %v1988, -inf
        %v2089 = vrot.slane %v2088, 4
        %v2090 = vmax.f32 %v2088, %v2089
        %v2091 = vrot.slane %v2090, 2
        %v2092 = vmax.f32 %v2090, %v2091
        %v2093 = vrot.slane %v2092, 1
        %v2094 = vmax.f32 %v2092, %v2093
        %v2095 = vsel %vm471, %v1989, -inf
        %v2096 = vrot.slane %v2095, 4
        %v2097 = vmax.f32 %v2095, %v2096
        %v2098 = vrot.slane %v2097, 2
        %v2099 = vmax.f32 %v2097, %v2098
        %v2100 = vrot.slane %v2099, 1
        %v2101 = vmax.f32 %v2099, %v2100
        %v2102 = vadd.f32 %v1862, %v1996
        %v2103 = vadd.f32 %v1863, %v2003
        %v2104 = vadd.f32 %v1864, %v2010
        %v2105 = vadd.f32 %v1865, %v2017
        %v2106 = vadd.f32 %v1866, %v2024
        %v2107 = vadd.f32 %v1867, %v2031
        %v2108 = vadd.f32 %v1868, %v2038
        %v2109 = vadd.f32 %v1869, %v2045
        %v2110 = vadd.f32 %v1870, %v2052
        %v2111 = vadd.f32 %v1871, %v2059
        %v2112 = vadd.f32 %v1872, %v2066
        %v2113 = vadd.f32 %v1873, %v2073
        %v2114 = vadd.f32 %v1874, %v2080
        %v2115 = vadd.f32 %v1875, %v2087
        %v2116 = vadd.f32 %v1876, %v2094
        %v2117 = vadd.f32 %v1877, %v2101
        %vm2134 = vcmask 1041409
        %v2135 = vsel %vm2134, %v2103, %v2102
        %vm2136 = vcmask 1042434
        %v2137 = vsel %vm2136, %v2104, %v2135
        %vm2138 = vcmask 1043459
        %v2139 = vsel %vm2138, %v2105, %v2137
        %vm2140 = vcmask 1044484
        %v2141 = vsel %vm2140, %v2106, %v2139
        %vm2142 = vcmask 1045509
        %v2143 = vsel %vm2142, %v2107, %v2141
        %vm2144 = vcmask 1046534
        %v2145 = vsel %vm2144, %v2108, %v2143
        %vm2146 = vcmask 1047559
        %v2147 = vsel %vm2146, %v2109, %v2145
        %v2148 = vsel %vm2134, %v2111, %v2110
        %v2149 = vsel %vm2136, %v2112, %v2148
        %v2150 = vsel %vm2138, %v2113, %v2149
        %v2151 = vsel %vm2140, %v2114, %v2150
        %v2152 = vsel %vm2142, %v2115, %v2151
        %v2153 = vsel %vm2144, %v2116, %v2152
        %v2154 = vsel %vm2146, %v2117, %v2153
        %2157 = vst.msk [vmem:[%s191] sm:$0xff] %vm471, %v2147
        %2158 = vst.msk [vmem:[%s191 + $0x8] sm:$0xff] %vm471, %v2154
        %s2159 = sand.u32 %s115, 1
        %s2160 = scalar_lea.sflag [#allocation3], %s2159
        %s2161 = sand.u32 %s115, 1
        %s2162 = smul.addr %s2161, 16
        %s2163 = scalar_lea.vmem [#allocation2], %s2162
        // Predicated region
        $region37: #{tpu_custom_call.1} parent=35 // pred_check
          %p2164 = pneg %p125
        $region38: #{tpu_custom_call.1} parent=35 // pred_check_branch
          %2166 = sbr.rel (%p2164) target = $region40
        $region39: #{tpu_custom_call.1} parent=35 // pred_region
          %s2167 = smul.u32 2, %s18
          %s2169 = ssub.s32 256, 256
          %2170 = vsyncadd %s2160, %s2169
          %s2171 = smul.addr %s2167, 128
          %s2172 = scalar_lea.hbm %s4, %s2171
          %s2173 = sshll.u32 %s2163, 4
          %s2174 = int_to_ptr.vmem [resolvable:$true] %s2173
          %2179 = dma.vmem_to_hbm [thread:$0]  %s2174, 256, %s2172, %s2160, 128, 128, 8
        $region40: #{tpu_custom_call.1} parent=35 // pred_fallthru
          _
      $region36: #{tpu_custom_call.1} parent=5 // pred_fallthru
        _
      %p2180 = scmp.le.s32.totalorder 2, %s13
      // Predicated region
      $region41: #{tpu_custom_call.1} parent=5 // pred_check
        %p2181 = pneg %p2180
      $region42: #{tpu_custom_call.1} parent=5 // pred_check_branch
        %2183 = sbr.rel (%p2181) target = $region44
      $region43: #{tpu_custom_call.1} parent=5 // pred_region
        %s2184 = ssub.s32 %s13, 2
        // Predicated region
        $region45: #{tpu_custom_call.1} parent=43 // pred_check
          %p2185 = pneg %p131
        $region46: #{tpu_custom_call.1} parent=43 // pred_check_branch
          %2187 = sbr.rel (%p2185) target = $region48
        $region47: #{tpu_custom_call.1} parent=43 // pred_region
          %s2188 = sand.u32 %s116, 1
          %s2189 = scalar_lea.sflag [#allocation3], %s2188
          %s2190 = sand.u32 %s116, 1
          %s2191 = smul.addr %s2190, 16
          %s2192 = scalar_lea.vmem [#allocation2], %s2191
          %2193 = dma.done %s2189, 256
        $region48: #{tpu_custom_call.1} parent=43 // pred_fallthru
          _
      $region44: #{tpu_custom_call.1} parent=5 // pred_fallthru
        _
    $region6: #{tpu_custom_call.1} parent=1 // loop_footer
      %s17 = sadd.s32 1, %s13
    $region7: #{tpu_custom_call.1} parent=1 // loop_footer_branch
      %12 = sbr.rel target = $region3
    $region8: #{tpu_custom_call.1} parent=1 // loop_exit
      _
    %2194 = vsyncpa [#allocation3], 1
    %s2195 = scalar_lea.sflag [#allocation3], 1
    %2196 = vsyncpa %s2195, 1

</llo_original>
